<compile_context>
chip_gen: v7x
topology: tpu7x:2x2x1
jax: 0.10.0
libtpu: 0.0.40
codegen_flags: <defaults>
</compile_context>

<pallas_src>
import functools

import jax
import jax.numpy as jnp
from jax.experimental import pallas as pl
from jax.experimental.pallas import tpu as pltpu

_LANE = 128
_SUBLANE_BF16 = 16          # bf16 vreg packs (16, 128)
_NEG_BIG = -1e30            # pad-lane bias: exp(logit - max) underflows to exactly 0


def _round_up(x, m):
    return ((x + m - 1) // m) * m


def _num_tensorcores():
    """1 tile on v5e/v6e (one TC per chip), 2 balanced tiles on v7x (two TCs)."""
    try:
        kind = jax.devices()[0].device_kind.lower()
        if "v7" in kind or "7x" in kind:
            return 2
    except Exception:
        pass
    return 1


def _mlp_softmax_kernel(n_layers, *refs):
    """Fused forward: (Linear -> ReLU) * (n_layers-1) -> Linear -> softmax(dim=1).

    refs = (x_ref, w0_ref, b0_ref, w1_ref, b1_ref, ..., out_ref)
    x / weights are bf16 (MXU operands); biases and all elementwise math are f32.
    All feature dims are pre-padded to 128 lanes on the host.
    """
    x_ref = refs[0]
    out_ref = refs[-1]
    param_refs = refs[1:-1]   # alternating (w, b) pairs

    x = x_ref[...]            # bf16 (tb, 128)
    logits = None
    for layer in range(n_layers):
        w = param_refs[2 * layer][...]        # bf16 (128, 128)
        b = param_refs[2 * layer + 1][...]    # f32  (1, 128)
        y = jnp.dot(x, w, preferred_element_type=jnp.float32) + b
        if layer < n_layers - 1:
            # ReLU (padded lanes stay 0), back to bf16 for the next MXU pass.
            x = jnp.maximum(y, 0.0).astype(jnp.bfloat16)
        else:
            logits = y        # final logits stay f32

    # Numerically stable softmax over dim=1.  Padded lanes carry a -1e30 bias,
    # so exp(logit - max) == 0 there and they do not perturb the denominator.
    m = jnp.max(logits, axis=1, keepdims=True)
    e = jnp.exp(logits - m)
    denom = jnp.sum(e, axis=1, keepdims=True)
    out_ref[...] = (e / denom).astype(out_ref.dtype)   # exact divide: rows sum to 1


def _resident_spec(shape):
    """Full-block spec pinned in VMEM for the whole grid; no double-buffering."""
    return pl.BlockSpec(shape, lambda i: (0, 0), pipeline_mode=pl.Buffered(1))


def parameterized_policy_forward(net_input, weights, biases, *, n_tiles=None):
    """Run the fused MLP-with-softmax Pallas kernel.

    net_input: (batch, input_dim) float32
    weights:   list of (in_i, out_i) float32 arrays (already transposed vs PyTorch)
    biases:    list of (out_i,) float32 arrays
    n_tiles:   number of batch tiles / grid steps; default = #TensorCores per chip
    """
    n_layers = len(weights)
    batch, in_dim = net_input.shape
    out_dim = weights[-1].shape[1]

    # ---- grid-first batch tiling (derive tile from grid, not grid from tile) --
    if n_tiles is None:
        n_tiles = _num_tensorcores()
    n_tiles = max(1, min(int(n_tiles), pl.cdiv(batch, _SUBLANE_BF16)))
    tb = _round_up(pl.cdiv(batch, n_tiles), _SUBLANE_BF16)
    padded_batch = n_tiles * tb
    grid = (n_tiles,)

    # ---- lane-pad every feature dim to a multiple of 128 ---------------------
    dims = [in_dim] + [w.shape[1] for w in weights]
    pdims = [_round_up(d, _LANE) for d in dims]
    out_pad = pdims[-1]

    x = jnp.pad(net_input, ((0, padded_batch - batch), (0, pdims[0] - in_dim)))
    x_bf16 = x.astype(jnp.bfloat16)

    w_padded, b_padded = [], []
    for i, (w, b) in enumerate(zip(weights, biases)):
        wp = jnp.pad(w, ((0, pdims[i] - w.shape[0]), (0, pdims[i + 1] - w.shape[1])))
        if i < n_layers - 1:
            bp = jnp.pad(b, ((0, pdims[i + 1] - b.shape[0]),))              # ReLU keeps pads at 0
        else:
            bp = jnp.pad(b, ((0, pdims[i + 1] - b.shape[0]),),
                         constant_values=jnp.float32(_NEG_BIG))             # exp -> 0 on pad lanes
        w_padded.append(wp.astype(jnp.bfloat16))
        b_padded.append(bp.astype(jnp.float32).reshape(1, -1))

    args = [x_bf16]
    for w, b in zip(w_padded, b_padded):
        args.append(w)
        args.append(b)

    in_specs = [pl.BlockSpec((tb, pdims[0]), lambda i: (i, 0))]   # streamed per tile
    for w, b in zip(w_padded, b_padded):
        in_specs.append(_resident_spec(w.shape))
        in_specs.append(_resident_spec(b.shape))
    out_spec = pl.BlockSpec((tb, out_pad), lambda i: (i, 0))

    # ---- advisory cost estimate ----------------------------------------------
    flops = 2 * padded_batch * sum(pdims[i] * pdims[i + 1] for i in range(n_layers))
    bytes_accessed = (x_bf16.size * 2
                      + sum(w.size * 2 for w in w_padded)
                      + sum(b.size * 4 for b in b_padded)
                      + padded_batch * out_pad * 4)
    cost = pl.CostEstimate(flops=flops,
                           transcendentals=padded_batch * out_pad,
                           bytes_accessed=bytes_accessed)

    kernel = functools.partial(_mlp_softmax_kernel, n_layers)

    out = pl.pallas_call(
        kernel,
        out_shape=jax.ShapeDtypeStruct((padded_batch, out_pad), jnp.float32),
        grid=grid,
        in_specs=in_specs,
        out_specs=out_spec,
        compiler_params=pltpu.CompilerParams(
            dimension_semantics=("parallel",)),   # shards the 2 tiles across TCs on v7x
        cost_estimate=cost,
    )(*args)

    return out[:batch, :out_dim]


def init_params(key, input_dim, layers_sizes, output_dim):
    """Deterministic init mimicking nn.Linear's default U(-1/sqrt(fan_in), +1/sqrt(fan_in)).

    Returns weights already transposed to (in, out) for the kernel.
    """
    dims = [input_dim] + list(layers_sizes) + [output_dim]
    weights, biases = [], []
    for i in range(len(dims) - 1):
        fan_in, fan_out = dims[i], dims[i + 1]
        key, wk, bk = jax.random.split(key, 3)
        bound = 1.0 / jnp.sqrt(jnp.float32(fan_in))
        w = jax.random.uniform(wk, (fan_in, fan_out), jnp.float32, -bound, bound)
        b = jax.random.uniform(bk, (fan_out,), jnp.float32, -bound, bound)
        weights.append(w)
        biases.append(b)
    return weights, biases


if __name__ == "__main__":
    key = jax.random.PRNGKey(0)

    # Shapes consistent with the module: input_dim=16, layers_sizes=(32, 32), output_dim=4.
    # batch=600 -> padded to 608 rows (1 tile on v5e/v6e, 2 balanced 304-row tiles on v7x).
    batch = 600
    input_dim = 16
    layers_sizes = (32, 32)
    output_dim = 4

    key, xk = jax.random.split(key)
    x = jax.random.normal(xk, (batch, input_dim), jnp.float32)

    weights, biases = init_params(key, input_dim, layers_sizes, output_dim)

    out = parameterized_policy_forward(x, weights, biases)
    out = jax.block_until_ready(out)
    assert out.shape == (batch, output_dim)

    # Reference 1: mirrors the kernel's bf16-operand / f32-accumulate math exactly.
    h = x.astype(jnp.bfloat16)
    logits = None
    for i, (w, b) in enumerate(zip(weights, biases)):
        logits = jnp.dot(h, w.astype(jnp.bfloat16),
                         preferred_element_type=jnp.float32) + b
        if i < len(weights) - 1:
            h = jnp.maximum(logits, 0.0).astype(jnp.bfloat16)
    ref_bf16 = jax.nn.softmax(logits, axis=1)

    # Reference 2: full-f32 math, matching the original PyTorch module's numerics.
    hf = x
    logits_f = None
    for i, (w, b) in enumerate(zip(weights, biases)):
        logits_f = jnp.dot(hf, w) + b
        if i < len(weights) - 1:
            hf = jnp.maximum(logits_f, 0.0)
    ref_f32 = jax.nn.softmax(logits_f, axis=1)

    err_bf16 = float(jnp.max(jnp.abs(out - ref_bf16)))
    err_f32 = float(jnp.max(jnp.abs(out - ref_f32)))
    assert jnp.allclose(out, ref_bf16, atol=1e-4, rtol=0), err_bf16     # matches kernel math
    assert jnp.allclose(out, ref_f32, atol=2e-2, rtol=0), err_f32       # close to f32 module
    assert jnp.allclose(jnp.sum(out, axis=1), 1.0, atol=1e-5)           # exact-divide softmax

    print("KERNEL_OK")
</pallas_src>

<mosaic_0001>
module attributes {stable_mosaic.version = 11 : i64} {
  func.func @_mlp_softmax_kernel(%arg0: i32, %arg1: memref<608x128xbf16, #tpu.memory_space<vmem>>, %arg2: memref<128x128xbf16, #tpu.memory_space<vmem>>, %arg3: memref<1x128xf32, #tpu.memory_space<vmem>>, %arg4: memref<128x128xbf16, #tpu.memory_space<vmem>>, %arg5: memref<1x128xf32, #tpu.memory_space<vmem>>, %arg6: memref<128x128xbf16, #tpu.memory_space<vmem>>, %arg7: memref<1x128xf32, #tpu.memory_space<vmem>>, %arg8: memref<608x128xf32, #tpu.memory_space<vmem>>) attributes {dimension_semantics = [#tpu.dimension_semantics<parallel>], iteration_bounds = array<i64: 1>, scalar_prefetch = 0 : i64, scratch_operands = 0 : i64, tpu.core_type = #tpu.core_type<tc>, window_params = [{transform_indices = @transform_0, window_bounds = array<i64: 608, 128>}, {pipeline_mode = #tpu.pipeline_mode<synchronous>, transform_indices = @transform_1, window_bounds = array<i64: 128, 128>}, {pipeline_mode = #tpu.pipeline_mode<synchronous>, transform_indices = @transform_2, window_bounds = array<i64: 1, 128>}, {pipeline_mode = #tpu.pipeline_mode<synchronous>, transform_indices = @transform_3, window_bounds = array<i64: 128, 128>}, {pipeline_mode = #tpu.pipeline_mode<synchronous>, transform_indices = @transform_4, window_bounds = array<i64: 1, 128>}, {pipeline_mode = #tpu.pipeline_mode<synchronous>, transform_indices = @transform_5, window_bounds = array<i64: 128, 128>}, {pipeline_mode = #tpu.pipeline_mode<synchronous>, transform_indices = @transform_6, window_bounds = array<i64: 1, 128>}, {transform_indices = @transform_7, window_bounds = array<i64: 608, 128>}]} {
    %c0 = arith.constant 0 : index
    %c0_0 = arith.constant 0 : index
    %0 = vector.load %arg1[%c0, %c0_0] : memref<608x128xbf16, #tpu.memory_space<vmem>>, vector<608x128xbf16>
    %c0_1 = arith.constant 0 : index
    %c0_2 = arith.constant 0 : index
    %1 = vector.load %arg2[%c0_1, %c0_2] : memref<128x128xbf16, #tpu.memory_space<vmem>>, vector<128x128xbf16>
    %c0_3 = arith.constant 0 : index
    %c0_4 = arith.constant 0 : index
    %2 = vector.load %arg3[%c0_3, %c0_4] : memref<1x128xf32, #tpu.memory_space<vmem>>, vector<1x128xf32>
    %cst = arith.constant dense<0.000000e+00> : vector<608x128xf32>
    %3 = tpu.matmul %0, %1, %cst {dimension_numbers = #tpu.dot_dimension_numbers<[1], [0], [0], [1], [0, 0, 1, 1], [], []>} : vector<608x128xbf16>, vector<128x128xbf16>, vector<608x128xf32> -> vector<608x128xf32>
    %4 = vector.broadcast %2 : vector<1x128xf32> to vector<608x128xf32>
    %5 = arith.addf %3, %4 : vector<608x128xf32>
    %cst_5 = arith.constant 0.000000e+00 : f32
    %6 = vector.broadcast %cst_5 : f32 to vector<608x128xf32>
    %7 = arith.maximumf %5, %6 : vector<608x128xf32>
    %8 = arith.truncf %7 : vector<608x128xf32> to vector<608x128xbf16>
    %c0_6 = arith.constant 0 : index
    %c0_7 = arith.constant 0 : index
    %9 = vector.load %arg4[%c0_6, %c0_7] : memref<128x128xbf16, #tpu.memory_space<vmem>>, vector<128x128xbf16>
    %c0_8 = arith.constant 0 : index
    %c0_9 = arith.constant 0 : index
    %10 = vector.load %arg5[%c0_8, %c0_9] : memref<1x128xf32, #tpu.memory_space<vmem>>, vector<1x128xf32>
    %cst_10 = arith.constant dense<0.000000e+00> : vector<608x128xf32>
    %11 = tpu.matmul %8, %9, %cst_10 {dimension_numbers = #tpu.dot_dimension_numbers<[1], [0], [0], [1], [0, 0, 1, 1], [], []>} : vector<608x128xbf16>, vector<128x128xbf16>, vector<608x128xf32> -> vector<608x128xf32>
    %12 = vector.broadcast %10 : vector<1x128xf32> to vector<608x128xf32>
    %13 = arith.addf %11, %12 : vector<608x128xf32>
    %cst_11 = arith.constant 0.000000e+00 : f32
    %14 = vector.broadcast %cst_11 : f32 to vector<608x128xf32>
    %15 = arith.maximumf %13, %14 : vector<608x128xf32>
    %16 = arith.truncf %15 : vector<608x128xf32> to vector<608x128xbf16>
    %c0_12 = arith.constant 0 : index
    %c0_13 = arith.constant 0 : index
    %17 = vector.load %arg6[%c0_12, %c0_13] : memref<128x128xbf16, #tpu.memory_space<vmem>>, vector<128x128xbf16>
    %c0_14 = arith.constant 0 : index
    %c0_15 = arith.constant 0 : index
    %18 = vector.load %arg7[%c0_14, %c0_15] : memref<1x128xf32, #tpu.memory_space<vmem>>, vector<1x128xf32>
    %cst_16 = arith.constant dense<0.000000e+00> : vector<608x128xf32>
    %19 = tpu.matmul %16, %17, %cst_16 {dimension_numbers = #tpu.dot_dimension_numbers<[1], [0], [0], [1], [0, 0, 1, 1], [], []>} : vector<608x128xbf16>, vector<128x128xbf16>, vector<608x128xf32> -> vector<608x128xf32>
    %20 = vector.broadcast %18 : vector<1x128xf32> to vector<608x128xf32>
    %21 = arith.addf %19, %20 : vector<608x128xf32>
    %cst_17 = arith.constant dense<0xFF800000> : vector<608xf32>
    %22 = vector.multi_reduction <maximumf>, %21, %cst_17 [1] : vector<608x128xf32> to vector<608xf32>
    %23 = vector.shape_cast %22 : vector<608xf32> to vector<608x1xf32>
    %24 = vector.broadcast %23 : vector<608x1xf32> to vector<608x128xf32>
    %25 = arith.subf %21, %24 : vector<608x128xf32>
    %26 = math.exp %25 : vector<608x128xf32>
    %cst_18 = arith.constant dense<0.000000e+00> : vector<608xf32>
    %27 = vector.multi_reduction <add>, %26, %cst_18 [1] : vector<608x128xf32> to vector<608xf32>
    %28 = vector.shape_cast %27 : vector<608xf32> to vector<608x1xf32>
    %29 = vector.broadcast %28 : vector<608x1xf32> to vector<608x128xf32>
    %30 = arith.divf %26, %29 : vector<608x128xf32>
    %c0_19 = arith.constant 0 : index
    %c0_20 = arith.constant 0 : index
    %31 = vector.load %arg8[%c0_19, %c0_20] : memref<608x128xf32, #tpu.memory_space<vmem>>, vector<608x128xf32>
    tpu.vector_store %arg8[%c0_19, %c0_20], %30 {strides = array<i32>} : memref<608x128xf32, #tpu.memory_space<vmem>>, vector<608x128xf32>,
    return
  }
  func.func @transform_0(%arg0: i32) -> (i32, i32) {
    %c0_i32 = arith.constant 0 : i32
    %c0_i32_0 = arith.constant 0 : i32
    return %arg0, %c0_i32 : i32, i32
  }
  func.func @transform_1(%arg0: i32) -> (i32, i32) {
    %c0_i32 = arith.constant 0 : i32
    %c0_i32_0 = arith.constant 0 : i32
    %c0_i32_1 = arith.constant 0 : i32
    return %c0_i32, %c0_i32_0 : i32, i32
  }
  func.func @transform_2(%arg0: i32) -> (i32, i32) {
    %c0_i32 = arith.constant 0 : i32
    %c0_i32_0 = arith.constant 0 : i32
    %c0_i32_1 = arith.constant 0 : i32
    return %c0_i32, %c0_i32_0 : i32, i32
  }
  func.func @transform_3(%arg0: i32) -> (i32, i32) {
    %c0_i32 = arith.constant 0 : i32
    %c0_i32_0 = arith.constant 0 : i32
    %c0_i32_1 = arith.constant 0 : i32
    return %c0_i32, %c0_i32_0 : i32, i32
  }
  func.func @transform_4(%arg0: i32) -> (i32, i32) {
    %c0_i32 = arith.constant 0 : i32
    %c0_i32_0 = arith.constant 0 : i32
    %c0_i32_1 = arith.constant 0 : i32
    return %c0_i32, %c0_i32_0 : i32, i32
  }
  func.func @transform_5(%arg0: i32) -> (i32, i32) {
    %c0_i32 = arith.constant 0 : i32
    %c0_i32_0 = arith.constant 0 : i32
    %c0_i32_1 = arith.constant 0 : i32
    return %c0_i32, %c0_i32_0 : i32, i32
  }
  func.func @transform_6(%arg0: i32) -> (i32, i32) {
    %c0_i32 = arith.constant 0 : i32
    %c0_i32_0 = arith.constant 0 : i32
    %c0_i32_1 = arith.constant 0 : i32
    return %c0_i32, %c0_i32_0 : i32, i32
  }
  func.func @transform_7(%arg0: i32) -> (i32, i32) {
    %c0_i32 = arith.constant 0 : i32
    %c0_i32_0 = arith.constant 0 : i32
    return %arg0, %c0_i32 : i32, i32
  }
}

</mosaic_0001>

<llo_original>
// kernel: tpu_custom_call.1
$region0: #{tpu_custom_call.1}
  #allocation0 [shape = 'u32[]', space=smem, size = 0x4, offset = 0x4, fixed_abs, tag = 'smem constant byte address 0x4 - core index']
  #allocation1 [shape = 'u32[144,128]{1,0:T(1,128)}', space=vmem, size = 0x12000, scoped, tag = 'internal scratch']
  %s0 = inlined_call_operand.hbm [shape: bf16[608,128], index: 0, kind: input, shape index: {}]
  %s1 = inlined_call_operand.hbm [shape: bf16[128,128], index: 1, kind: input, shape index: {}]
  %s2 = inlined_call_operand.vmem [shape: f32[1,128], index: 2, kind: input, shape index: {}]
  %s3 = inlined_call_operand.hbm [shape: bf16[128,128], index: 3, kind: input, shape index: {}]
  %s4 = inlined_call_operand.vmem [shape: f32[1,128], index: 4, kind: input, shape index: {}]
  %s5 = inlined_call_operand.hbm [shape: bf16[128,128], index: 5, kind: input, shape index: {}]
  %s6 = inlined_call_operand.vmem [shape: f32[1,128], index: 6, kind: input, shape index: {}]
  %s7 = inlined_call_operand.hbm [shape: f32[608,128], index: 7, kind: output, shape index: {}]
  %s8 = sld [smem:[#allocation0]]
  $region54: #{tpu_custom_call.1} parent=0
    _
  %s10 = ssub.s32 1, %s8
  %s11 = scalar_select 0, %s10, %s8
  $region1: #{tpu_custom_call.1} parent=0
    #allocation2 [shape = 'u8[155648]{0}', space=vmem, size = 0x26000, scoped, tag = 'input window, operand 0, single buffered']
    #allocation3 [shape = 's32[1]{0}', space=sflag, size = 0x4, scoped, tag = 'scoped memory for tpu_custom_call.1']
    #allocation4 [shape = 's32[1]{0}', space=sflag, size = 0x4, scoped, tag = 'scoped memory for tpu_custom_call.1']
    #allocation5 [shape = 'u8[32768]{0}', space=vmem, size = 0x8000, scoped, tag = 'input window, operand 1, single buffered']
    #allocation6 [shape = 's32[1]{0}', space=sflag, size = 0x4, scoped, tag = 'scoped memory for tpu_custom_call.1']
    #allocation7 [shape = 'u8[32768]{0}', space=vmem, size = 0x8000, scoped, tag = 'input window, operand 3, single buffered']
    #allocation8 [shape = 'u8[32768]{0}', space=vmem, size = 0x8000, scoped, tag = 'input window, operand 5, single buffered']
    #allocation9 [shape = 's32[1]{0}', space=sflag, size = 0x4, scoped, tag = 'scoped memory for tpu_custom_call.1']
    #allocation10 [shape = 'u8[311296]{0}', space=vmem, size = 0x4c000, scoped, tag = 'output window, operand 0, single buffered']
    %12 = vsyncpa [#allocation3], 0
    %13 = vsyncpa [#allocation6], 0
    %14 = vsyncpa [#allocation9], 0
    %15 = vsyncpa [#allocation4], 0
    // Predicated region
    $region2: #{tpu_custom_call.1} parent=1 // pred_check
      _
    $region3: #{tpu_custom_call.1} parent=1 // pred_check_branch
      %17 = sbr.rel (0) target = $region5
    $region4: #{tpu_custom_call.1} parent=1 // pred_region
      %s19 = ssub.s32 4864, 4864
      %20 = vsyncadd [#allocation3], %s19
      %s21 = sshll.u32 [#allocation2], 4
      %s22 = int_to_ptr.vmem [resolvable:$true] %s21
      %27 = dma.hbm_to_vmem [thread:$0]  %s0, 4864, %s22, [#allocation3], 64, 64, 4
    $region5: #{tpu_custom_call.1} parent=1 // pred_fallthru
      _
    // Predicated region
    $region6: #{tpu_custom_call.1} parent=1 // pred_check
      _
    $region7: #{tpu_custom_call.1} parent=1 // pred_check_branch
      %29 = sbr.rel (0) target = $region9
    $region8: #{tpu_custom_call.1} parent=1 // pred_region
      %s31 = ssub.s32 1024, 1024
      %32 = vsyncadd [#allocation6], %s31
      %s33 = sshll.u32 [#allocation5], 4
      %s34 = int_to_ptr.vmem [resolvable:$true] %s33
      %39 = dma.hbm_to_vmem [thread:$0]  %s1, 1024, %s34, [#allocation6], 64, 64, 4
    $region9: #{tpu_custom_call.1} parent=1 // pred_fallthru
      _
    // Predicated region
    $region10: #{tpu_custom_call.1} parent=1 // pred_check
      _
    $region11: #{tpu_custom_call.1} parent=1 // pred_check_branch
      %41 = sbr.rel (0) target = $region13
    $region12: #{tpu_custom_call.1} parent=1 // pred_region
      _
    $region13: #{tpu_custom_call.1} parent=1 // pred_fallthru
      _
    // Predicated region
    $region14: #{tpu_custom_call.1} parent=1 // pred_check
      _
    $region15: #{tpu_custom_call.1} parent=1 // pred_check_branch
      %43 = sbr.rel (0) target = $region17
    $region16: #{tpu_custom_call.1} parent=1 // pred_region
      %s45 = ssub.s32 1024, 1024
      %46 = vsyncadd [#allocation6], %s45
      %s47 = sshll.u32 [#allocation7], 4
      %s48 = int_to_ptr.vmem [resolvable:$true] %s47
      %53 = dma.hbm_to_vmem [thread:$0]  %s3, 1024, %s48, [#allocation6], 64, 64, 4
    $region17: #{tpu_custom_call.1} parent=1 // pred_fallthru
      _
    // Predicated region
    $region18: #{tpu_custom_call.1} parent=1 // pred_check
      _
    $region19: #{tpu_custom_call.1} parent=1 // pred_check_branch
      %55 = sbr.rel (0) target = $region21
    $region20: #{tpu_custom_call.1} parent=1 // pred_region
      _
    $region21: #{tpu_custom_call.1} parent=1 // pred_fallthru
      _
    // Predicated region
    $region22: #{tpu_custom_call.1} parent=1 // pred_check
      _
    $region23: #{tpu_custom_call.1} parent=1 // pred_check_branch
      %57 = sbr.rel (0) target = $region25
    $region24: #{tpu_custom_call.1} parent=1 // pred_region
      %s59 = ssub.s32 1024, 1024
      %60 = vsyncadd [#allocation9], %s59
      %s61 = sshll.u32 [#allocation8], 4
      %s62 = int_to_ptr.vmem [resolvable:$true] %s61
      %67 = dma.hbm_to_vmem [thread:$0]  %s5, 1024, %s62, [#allocation9], 64, 64, 4
    $region25: #{tpu_custom_call.1} parent=1 // pred_fallthru
      _
    // Predicated region
    $region26: #{tpu_custom_call.1} parent=1 // pred_check
      _
    $region27: #{tpu_custom_call.1} parent=1 // pred_check_branch
      %69 = sbr.rel (0) target = $region29
    $region28: #{tpu_custom_call.1} parent=1 // pred_region
      _
    $region29: #{tpu_custom_call.1} parent=1 // pred_fallthru
      _
    // Predicated region
    $region30: #{tpu_custom_call.1} parent=1 // pred_check
      _
    $region31: #{tpu_custom_call.1} parent=1 // pred_check_branch
      %71 = sbr.rel (0) target = $region33
    $region32: #{tpu_custom_call.1} parent=1 // pred_region
      %72 = dma.done [#allocation3], 4864
    $region33: #{tpu_custom_call.1} parent=1 // pred_fallthru
      _
    // Predicated region
    $region34: #{tpu_custom_call.1} parent=1 // pred_check
      _
    $region35: #{tpu_custom_call.1} parent=1 // pred_check_branch
      %74 = sbr.rel (0) target = $region37
    $region36: #{tpu_custom_call.1} parent=1 // pred_region
      %75 = dma.done [#allocation6], 1024
    $region37: #{tpu_custom_call.1} parent=1 // pred_fallthru
      _
    // Predicated region
    $region38: #{tpu_custom_call.1} parent=1 // pred_check
      _
    $region39: #{tpu_custom_call.1} parent=1 // pred_check_branch
      %77 = sbr.rel (0) target = $region41
    $region40: #{tpu_custom_call.1} parent=1 // pred_region
      %78 = dma.done [#allocation6], 1024
    $region41: #{tpu_custom_call.1} parent=1 // pred_fallthru
      _
    // Predicated region
    $region42: #{tpu_custom_call.1} parent=1 // pred_check
      _
    $region43: #{tpu_custom_call.1} parent=1 // pred_check_branch
      %80 = sbr.rel (0) target = $region45
    $region44: #{tpu_custom_call.1} parent=1 // pred_region
      %81 = dma.done [#allocation9], 1024
    $region45: #{tpu_custom_call.1} parent=1 // pred_fallthru
      _
    %v83 = vld [vmem:[#allocation2] sm:$0xf]
    %v84 = vld [vmem:[#allocation2 + $0x4] sm:$0xf]
    %v85 = vld [vmem:[#allocation2 + $0x8] sm:$0xf]
    %v86 = vld [vmem:[#allocation2 + $0xc] sm:$0xf]
    %v87 = vld [vmem:[#allocation2 + $0x10] sm:$0xf]
    %v88 = vld [vmem:[#allocation2 + $0x14] sm:$0xf]
    %v89 = vld [vmem:[#allocation2 + $0x18] sm:$0xf]
    %v90 = vld [vmem:[#allocation2 + $0x1c] sm:$0xf]
    %v91 = vld [vmem:[#allocation2 + $0x20] sm:$0xf]
    %v92 = vld [vmem:[#allocation2 + $0x24] sm:$0xf]
    %v93 = vld [vmem:[#allocation2 + $0x28] sm:$0xf]
    %v94 = vld [vmem:[#allocation2 + $0x2c] sm:$0xf]
    %v95 = vld [vmem:[#allocation2 + $0x30] sm:$0xf]
    %v96 = vld [vmem:[#allocation2 + $0x34] sm:$0xf]
    %v97 = vld [vmem:[#allocation2 + $0x38] sm:$0xf]
    %v98 = vld [vmem:[#allocation2 + $0x3c] sm:$0xf]
    %v99 = vld [vmem:[#allocation2 + $0x40] sm:$0xf]
    %v100 = vld [vmem:[#allocation2 + $0x44] sm:$0xf]
    %v101 = vld [vmem:[#allocation2 + $0x48] sm:$0xf]
    %v102 = vld [vmem:[#allocation2 + $0x4c] sm:$0xf]
    %v103 = vld [vmem:[#allocation2 + $0x50] sm:$0xf]
    %v104 = vld [vmem:[#allocation2 + $0x54] sm:$0xf]
    %v105 = vld [vmem:[#allocation2 + $0x58] sm:$0xf]
    %v106 = vld [vmem:[#allocation2 + $0x5c] sm:$0xf]
    %v107 = vld [vmem:[#allocation2 + $0x60] sm:$0xf]
    %v108 = vld [vmem:[#allocation2 + $0x64] sm:$0xf]
    %v109 = vld [vmem:[#allocation2 + $0x68] sm:$0xf]
    %v110 = vld [vmem:[#allocation2 + $0x6c] sm:$0xf]
    %v111 = vld [vmem:[#allocation2 + $0x70] sm:$0xf]
    %v112 = vld [vmem:[#allocation2 + $0x74] sm:$0xf]
    %v113 = vld [vmem:[#allocation2 + $0x78] sm:$0xf]
    %v114 = vld [vmem:[#allocation2 + $0x7c] sm:$0xf]
    %v115 = vld [vmem:[#allocation2 + $0x80] sm:$0xf]
    %v116 = vld [vmem:[#allocation2 + $0x84] sm:$0xf]
    %v117 = vld [vmem:[#allocation2 + $0x88] sm:$0xf]
    %v118 = vld [vmem:[#allocation2 + $0x8c] sm:$0xf]
    %v119 = vld [vmem:[#allocation2 + $0x90] sm:$0xf]
    %v120 = vld [vmem:[#allocation2 + $0x94] sm:$0xf]
    %v121 = vld [vmem:[#allocation2 + $0x98] sm:$0xf]
    %v122 = vld [vmem:[#allocation2 + $0x9c] sm:$0xf]
    %v123 = vld [vmem:[#allocation2 + $0xa0] sm:$0xf]
    %v124 = vld [vmem:[#allocation2 + $0xa4] sm:$0xf]
    %v125 = vld [vmem:[#allocation2 + $0xa8] sm:$0xf]
    %v126 = vld [vmem:[#allocation2 + $0xac] sm:$0xf]
    %v127 = vld [vmem:[#allocation2 + $0xb0] sm:$0xf]
    %v128 = vld [vmem:[#allocation2 + $0xb4] sm:$0xf]
    %v129 = vld [vmem:[#allocation2 + $0xb8] sm:$0xf]
    %v130 = vld [vmem:[#allocation2 + $0xbc] sm:$0xf]
    %v131 = vld [vmem:[#allocation2 + $0xc0] sm:$0xf]
    %v132 = vld [vmem:[#allocation2 + $0xc4] sm:$0xf]
    %v133 = vld [vmem:[#allocation2 + $0xc8] sm:$0xf]
    %v134 = vld [vmem:[#allocation2 + $0xcc] sm:$0xf]
    %v135 = vld [vmem:[#allocation2 + $0xd0] sm:$0xf]
    %v136 = vld [vmem:[#allocation2 + $0xd4] sm:$0xf]
    %v137 = vld [vmem:[#allocation2 + $0xd8] sm:$0xf]
    %v138 = vld [vmem:[#allocation2 + $0xdc] sm:$0xf]
    %v139 = vld [vmem:[#allocation2 + $0xe0] sm:$0xf]
    %v140 = vld [vmem:[#allocation2 + $0xe4] sm:$0xf]
    %v141 = vld [vmem:[#allocation2 + $0xe8] sm:$0xf]
    %v142 = vld [vmem:[#allocation2 + $0xec] sm:$0xf]
    %v143 = vld [vmem:[#allocation2 + $0xf0] sm:$0xf]
    %v144 = vld [vmem:[#allocation2 + $0xf4] sm:$0xf]
    %v145 = vld [vmem:[#allocation2 + $0xf8] sm:$0xf]
    %v146 = vld [vmem:[#allocation2 + $0xfc] sm:$0xf]
    %v147 = vld [vmem:[#allocation2 + $0x100] sm:$0xf]
    %v148 = vld [vmem:[#allocation2 + $0x104] sm:$0xf]
    %v149 = vld [vmem:[#allocation2 + $0x108] sm:$0xf]
    %v150 = vld [vmem:[#allocation2 + $0x10c] sm:$0xf]
    %v151 = vld [vmem:[#allocation2 + $0x110] sm:$0xf]
    %v152 = vld [vmem:[#allocation2 + $0x114] sm:$0xf]
    %v153 = vld [vmem:[#allocation2 + $0x118] sm:$0xf]
    %v154 = vld [vmem:[#allocation2 + $0x11c] sm:$0xf]
    %v155 = vld [vmem:[#allocation2 + $0x120] sm:$0xf]
    %v156 = vld [vmem:[#allocation2 + $0x124] sm:$0xf]
    %v157 = vld [vmem:[#allocation2 + $0x128] sm:$0xf]
    %v158 = vld [vmem:[#allocation2 + $0x12c] sm:$0xf]
    %v159 = vld [vmem:[#allocation5] sm:$0xf]
    %v160 = vld [vmem:[#allocation5 + $0x4] sm:$0xf]
    %v161 = vld [vmem:[#allocation5 + $0x8] sm:$0xf]
    %v162 = vld [vmem:[#allocation5 + $0xc] sm:$0xf]
    %v163 = vld [vmem:[#allocation5 + $0x10] sm:$0xf]
    %v164 = vld [vmem:[#allocation5 + $0x14] sm:$0xf]
    %v165 = vld [vmem:[#allocation5 + $0x18] sm:$0xf]
    %v166 = vld [vmem:[#allocation5 + $0x1c] sm:$0xf]
    %v167 = vld [vmem:[#allocation5 + $0x20] sm:$0xf]
    %v168 = vld [vmem:[#allocation5 + $0x24] sm:$0xf]
    %v169 = vld [vmem:[#allocation5 + $0x28] sm:$0xf]
    %v170 = vld [vmem:[#allocation5 + $0x2c] sm:$0xf]
    %v171 = vld [vmem:[#allocation5 + $0x30] sm:$0xf]
    %v172 = vld [vmem:[#allocation5 + $0x34] sm:$0xf]
    %v173 = vld [vmem:[#allocation5 + $0x38] sm:$0xf]
    %v174 = vld [vmem:[#allocation5 + $0x3c] sm:$0xf]
    %v175 = vld [vmem:[%s2] sm:$0x1]
    %v177 = vlaneseq
    %v178 = vshrl.u32 %v177, 7
    %v179 = vsub.s32 0, %v178
    %v180 = vrot.slane %v175, %v179
    %v258 = vunpack.c.l.b16 %v83
    %v259 = vunpack.c.l.b16 %v84
    %v260 = vunpack.c.l.b16 %v85
    %v261 = vunpack.c.l.b16 %v86
    %v262 = vunpack.c.l.b16 %v87
    %v263 = vunpack.c.l.b16 %v88
    %v264 = vunpack.c.l.b16 %v89
    %v265 = vunpack.c.l.b16 %v90
    %v266 = vunpack.c.l.b16 %v91
    %v267 = vunpack.c.l.b16 %v92
    %v268 = vunpack.c.l.b16 %v93
    %v269 = vunpack.c.l.b16 %v94
    %v270 = vunpack.c.l.b16 %v95
    %v271 = vunpack.c.l.b16 %v96
    %v272 = vunpack.c.l.b16 %v97
    %v273 = vunpack.c.l.b16 %v98
    %v274 = vunpack.c.l.b16 %v99
    %v275 = vunpack.c.l.b16 %v100
    %v276 = vunpack.c.l.b16 %v101
    %v277 = vunpack.c.l.b16 %v102
    %v278 = vunpack.c.l.b16 %v103
    %v279 = vunpack.c.l.b16 %v104
    %v280 = vunpack.c.l.b16 %v105
    %v281 = vunpack.c.l.b16 %v106
    %v282 = vunpack.c.l.b16 %v107
    %v283 = vunpack.c.l.b16 %v108
    %v284 = vunpack.c.l.b16 %v109
    %v285 = vunpack.c.l.b16 %v110
    %v286 = vunpack.c.l.b16 %v111
    %v287 = vunpack.c.l.b16 %v112
    %v288 = vunpack.c.l.b16 %v113
    %v289 = vunpack.c.l.b16 %v114
    %v290 = vunpack.c.l.b16 %v115
    %v291 = vunpack.c.l.b16 %v116
    %v292 = vunpack.c.l.b16 %v117
    %v293 = vunpack.c.l.b16 %v118
    %v294 = vunpack.c.l.b16 %v119
    %v295 = vunpack.c.l.b16 %v120
    %v296 = vunpack.c.l.b16 %v121
    %v297 = vunpack.c.l.b16 %v122
    %v298 = vunpack.c.l.b16 %v123
    %v299 = vunpack.c.l.b16 %v124
    %v300 = vunpack.c.l.b16 %v125
    %v301 = vunpack.c.l.b16 %v126
    %v302 = vunpack.c.l.b16 %v127
    %v303 = vunpack.c.l.b16 %v128
    %v304 = vunpack.c.l.b16 %v129
    %v305 = vunpack.c.l.b16 %v130
    %v306 = vunpack.c.l.b16 %v131
    %v307 = vunpack.c.l.b16 %v132
    %v308 = vunpack.c.l.b16 %v133
    %v309 = vunpack.c.l.b16 %v134
    %v310 = vunpack.c.l.b16 %v135
    %v311 = vunpack.c.l.b16 %v136
    %v312 = vunpack.c.l.b16 %v137
    %v313 = vunpack.c.l.b16 %v138
    %v314 = vunpack.c.l.b16 %v139
    %v315 = vunpack.c.l.b16 %v140
    %v316 = vunpack.c.l.b16 %v141
    %v317 = vunpack.c.l.b16 %v142
    %v318 = vunpack.c.l.b16 %v143
    %v319 = vunpack.c.l.b16 %v144
    %v320 = vunpack.c.l.b16 %v145
    %v321 = vunpack.c.l.b16 %v146
    %v322 = vunpack.c.l.b16 %v147
    %v323 = vunpack.c.l.b16 %v148
    %v324 = vunpack.c.l.b16 %v149
    %v325 = vunpack.c.l.b16 %v150
    %v326 = vunpack.c.l.b16 %v151
    %v327 = vunpack.c.l.b16 %v152
    %v328 = vunpack.c.l.b16 %v153
    %v329 = vunpack.c.l.b16 %v154
    %v330 = vunpack.c.l.b16 %v155
    %v331 = vunpack.c.l.b16 %v156
    %v332 = vunpack.c.l.b16 %v157
    %v333 = vunpack.c.l.b16 %v158
    %v334 = vpack.c.b16 %v259, %v258
    %v335 = vpack.c.b16 %v261, %v260
    %v336 = vpack.c.b16 %v263, %v262
    %v337 = vpack.c.b16 %v265, %v264
    %v338 = vpack.c.b16 %v267, %v266
    %v339 = vpack.c.b16 %v269, %v268
    %v340 = vpack.c.b16 %v271, %v270
    %v341 = vpack.c.b16 %v273, %v272
    %v342 = vpack.c.b16 %v275, %v274
    %v343 = vpack.c.b16 %v277, %v276
    %v344 = vpack.c.b16 %v279, %v278
    %v345 = vpack.c.b16 %v281, %v280
    %v346 = vpack.c.b16 %v283, %v282
    %v347 = vpack.c.b16 %v285, %v284
    %v348 = vpack.c.b16 %v287, %v286
    %v349 = vpack.c.b16 %v289, %v288
    %v350 = vpack.c.b16 %v291, %v290
    %v351 = vpack.c.b16 %v293, %v292
    %v352 = vpack.c.b16 %v295, %v294
    %v353 = vpack.c.b16 %v297, %v296
    %v354 = vpack.c.b16 %v299, %v298
    %v355 = vpack.c.b16 %v301, %v300
    %v356 = vpack.c.b16 %v303, %v302
    %v357 = vpack.c.b16 %v305, %v304
    %v358 = vpack.c.b16 %v307, %v306
    %v359 = vpack.c.b16 %v309, %v308
    %v360 = vpack.c.b16 %v311, %v310
    %v361 = vpack.c.b16 %v313, %v312
    %v362 = vpack.c.b16 %v315, %v314
    %v363 = vpack.c.b16 %v317, %v316
    %v364 = vpack.c.b16 %v319, %v318
    %v365 = vpack.c.b16 %v321, %v320
    %v366 = vpack.c.b16 %v323, %v322
    %v367 = vpack.c.b16 %v325, %v324
    %v368 = vpack.c.b16 %v327, %v326
    %v369 = vpack.c.b16 %v329, %v328
    %v370 = vpack.c.b16 %v331, %v330
    %v371 = vpack.c.b16 %v333, %v332
    %v426 = vunpack.c.l.b16 %v159
    %v427 = vunpack.c.l.b16 %v160
    %v428 = vunpack.c.l.b16 %v161
    %v429 = vunpack.c.l.b16 %v162
    %v430 = vunpack.c.l.b16 %v163
    %v431 = vunpack.c.l.b16 %v164
    %v432 = vunpack.c.l.b16 %v165
    %v433 = vunpack.c.l.b16 %v166
    %v434 = vunpack.c.l.b16 %v167
    %v435 = vunpack.c.l.b16 %v168
    %v436 = vunpack.c.l.b16 %v169
    %v437 = vunpack.c.l.b16 %v170
    %v438 = vunpack.c.l.b16 %v171
    %v439 = vunpack.c.l.b16 %v172
    %v440 = vunpack.c.l.b16 %v173
    %v441 = vunpack.c.l.b16 %v174
    %v442 = vpack.c.b16 %v427, %v426
    %v443 = vpack.c.b16 %v429, %v428
    %v444 = vpack.c.b16 %v431, %v430
    %v445 = vpack.c.b16 %v433, %v432
    %v446 = vpack.c.b16 %v435, %v434
    %v447 = vpack.c.b16 %v437, %v436
    %v448 = vpack.c.b16 %v439, %v438
    %v449 = vpack.c.b16 %v441, %v440
    %458 = vmatprep.subr.bf16.mxu0 0
    %459 = vmatpush1.bf16.msra.mxu0 %v442
    %460 = vmatprep.subr.bf16.mxu0 0
    %461 = vmatpush1.bf16.msra.mxu0 %v443
    %462 = vmatprep.subr.bf16.mxu0 0
    %463 = vmatpush1.bf16.msra.mxu0 %v444
    %464 = vmatprep.subr.bf16.mxu0 0
    %465 = vmatpush1.bf16.msra.mxu0 %v445
    %466 = vmatprep.subr.bf16.mxu0 0
    %467 = vmatpush1.bf16.msra.mxu0 %v446
    %468 = vmatprep.subr.bf16.mxu0 0
    %469 = vmatpush1.bf16.msra.mxu0 %v447
    %470 = vmatprep.subr.bf16.mxu0 0
    %471 = vmatpush1.bf16.msra.mxu0 %v448
    %472 = vmatprep.subr.bf16.mxu0 0
    %473 = vmatpush1.bf16.msra.mxu0 %v449
    %474 = vmatprep.subr.bf16.mxu0 0
    %475 = vmatpush1.bf16.msra.mxu0 0
    %476 = vmatprep.subr.bf16.mxu0 0
    %477 = vmatpush1.bf16.msra.mxu0 0
    %478 = vmatprep.subr.bf16.mxu0 0
    %479 = vmatpush1.bf16.msra.mxu0 0
    %480 = vmatprep.subr.bf16.mxu0 0
    %481 = vmatpush1.bf16.msra.mxu0 0
    %482 = vmatprep.subr.bf16.mxu0 0
    %483 = vmatpush1.bf16.msra.mxu0 0
    %484 = vmatprep.subr.bf16.mxu0 0
    %485 = vmatpush1.bf16.msra.mxu0 0
    %486 = vmatprep.subr.bf16.mxu0 0
    %487 = vmatpush1.bf16.msra.mxu0 0
    %488 = vmatprep.subr.bf16.mxu0 0
    %489 = vmatpush1.bf16.msra.mxu0 0
    %490 = vmatprep.mubr.bf16.mxu0 0
    %491 = vmatmul.mubr.bf16.gmra.mrb[0].mxu0 %v334
    %v492 = vpop.f32.mrb[0].mxu0
    %v493 = vadd.f32 %v180, %v492
    %v494 = vpop.f32.mrb[0].mxu0
    %v495 = vpop.f32.mrb[0].mxu0
    %v496 = vadd.f32 %v180, %v495
    %v497 = vpop.f32.mrb[0].mxu0
    %498 = vmatprep.mubr.bf16.mxu0 0
    %499 = vmatmul.mubr.bf16.gmra.mrb[0].mxu0 %v335
    %v500 = vpop.f32.mrb[0].mxu0
    %v501 = vadd.f32 %v180, %v500
    %v502 = vpop.f32.mrb[0].mxu0
    %v503 = vpop.f32.mrb[0].mxu0
    %v504 = vadd.f32 %v180, %v503
    %v505 = vpop.f32.mrb[0].mxu0
    %506 = vmatprep.mubr.bf16.mxu0 0
    %507 = vmatmul.mubr.bf16.gmra.mrb[0].mxu0 %v336
    %v508 = vpop.f32.mrb[0].mxu0
    %v509 = vadd.f32 %v180, %v508
    %v510 = vpop.f32.mrb[0].mxu0
    %v511 = vpop.f32.mrb[0].mxu0
    %v512 = vadd.f32 %v180, %v511
    %v513 = vpop.f32.mrb[0].mxu0
    %514 = vmatprep.mubr.bf16.mxu0 0
    %515 = vmatmul.mubr.bf16.gmra.mrb[0].mxu0 %v337
    %v516 = vpop.f32.mrb[0].mxu0
    %v517 = vadd.f32 %v180, %v516
    %v518 = vpop.f32.mrb[0].mxu0
    %v519 = vpop.f32.mrb[0].mxu0
    %v520 = vadd.f32 %v180, %v519
    %v521 = vpop.f32.mrb[0].mxu0
    %522 = vmatprep.mubr.bf16.mxu0 0
    %523 = vmatmul.mubr.bf16.gmra.mrb[0].mxu0 %v338
    %v524 = vpop.f32.mrb[0].mxu0
    %v525 = vadd.f32 %v180, %v524
    %v526 = vpop.f32.mrb[0].mxu0
    %v527 = vpop.f32.mrb[0].mxu0
    %v528 = vadd.f32 %v180, %v527
    %v529 = vpop.f32.mrb[0].mxu0
    %530 = vmatprep.mubr.bf16.mxu0 0
    %531 = vmatmul.mubr.bf16.gmra.mrb[0].mxu0 %v339
    %v532 = vpop.f32.mrb[0].mxu0
    %v533 = vadd.f32 %v180, %v532
    %v534 = vpop.f32.mrb[0].mxu0
    %v535 = vpop.f32.mrb[0].mxu0
    %v536 = vadd.f32 %v180, %v535
    %v537 = vpop.f32.mrb[0].mxu0
    %538 = vmatprep.mubr.bf16.mxu0 0
    %539 = vmatmul.mubr.bf16.gmra.mrb[0].mxu0 %v340
    %v540 = vpop.f32.mrb[0].mxu0
    %v541 = vadd.f32 %v180, %v540
    %v542 = vpop.f32.mrb[0].mxu0
    %v543 = vpop.f32.mrb[0].mxu0
    %v544 = vadd.f32 %v180, %v543
    %v545 = vpop.f32.mrb[0].mxu0
    %546 = vmatprep.mubr.bf16.mxu0 0
    %547 = vmatmul.mubr.bf16.gmra.mrb[0].mxu0 %v341
    %v548 = vpop.f32.mrb[0].mxu0
    %v549 = vadd.f32 %v180, %v548
    %v550 = vpop.f32.mrb[0].mxu0
    %v551 = vpop.f32.mrb[0].mxu0
    %v552 = vadd.f32 %v180, %v551
    %v553 = vpop.f32.mrb[0].mxu0
    %554 = vmatprep.mubr.bf16.mxu0 0
    %555 = vmatmul.mubr.bf16.gmra.mrb[0].mxu0 %v342
    %v556 = vpop.f32.mrb[0].mxu0
    %v557 = vadd.f32 %v180, %v556
    %v558 = vpop.f32.mrb[0].mxu0
    %v559 = vpop.f32.mrb[0].mxu0
    %v560 = vadd.f32 %v180, %v559
    %v561 = vpop.f32.mrb[0].mxu0
    %562 = vmatprep.mubr.bf16.mxu0 0
    %563 = vmatmul.mubr.bf16.gmra.mrb[0].mxu0 %v343
    %v564 = vpop.f32.mrb[0].mxu0
    %v565 = vadd.f32 %v180, %v564
    %v566 = vpop.f32.mrb[0].mxu0
    %v567 = vpop.f32.mrb[0].mxu0
    %v568 = vadd.f32 %v180, %v567
    %v569 = vpop.f32.mrb[0].mxu0
    %570 = vmatprep.mubr.bf16.mxu0 0
    %571 = vmatmul.mubr.bf16.gmra.mrb[0].mxu0 %v344
    %v572 = vpop.f32.mrb[0].mxu0
    %v573 = vadd.f32 %v180, %v572
    %v574 = vpop.f32.mrb[0].mxu0
    %v575 = vpop.f32.mrb[0].mxu0
    %v576 = vadd.f32 %v180, %v575
    %v577 = vpop.f32.mrb[0].mxu0
    %578 = vmatprep.mubr.bf16.mxu0 0
    %579 = vmatmul.mubr.bf16.gmra.mrb[0].mxu0 %v345
    %v580 = vpop.f32.mrb[0].mxu0
    %v581 = vadd.f32 %v180, %v580
    %v582 = vpop.f32.mrb[0].mxu0
    %v583 = vpop.f32.mrb[0].mxu0
    %v584 = vadd.f32 %v180, %v583
    %v585 = vpop.f32.mrb[0].mxu0
    %586 = vmatprep.mubr.bf16.mxu0 0
    %587 = vmatmul.mubr.bf16.gmra.mrb[0].mxu0 %v346
    %v588 = vpop.f32.mrb[0].mxu0
    %v589 = vadd.f32 %v180, %v588
    %v590 = vpop.f32.mrb[0].mxu0
    %v591 = vpop.f32.mrb[0].mxu0
    %v592 = vadd.f32 %v180, %v591
    %v593 = vpop.f32.mrb[0].mxu0
    %594 = vmatprep.mubr.bf16.mxu0 0
    %595 = vmatmul.mubr.bf16.gmra.mrb[0].mxu0 %v347
    %v596 = vpop.f32.mrb[0].mxu0
    %v597 = vadd.f32 %v180, %v596
    %v598 = vpop.f32.mrb[0].mxu0
    %v599 = vpop.f32.mrb[0].mxu0
    %v600 = vadd.f32 %v180, %v599
    %v601 = vpop.f32.mrb[0].mxu0
    %602 = vmatprep.mubr.bf16.mxu0 0
    %603 = vmatmul.mubr.bf16.gmra.mrb[0].mxu0 %v348
    %v604 = vpop.f32.mrb[0].mxu0
    %v605 = vadd.f32 %v180, %v604
    %v606 = vpop.f32.mrb[0].mxu0
    %v607 = vpop.f32.mrb[0].mxu0
    %v608 = vadd.f32 %v180, %v607
    %v609 = vpop.f32.mrb[0].mxu0
    %610 = vmatprep.mubr.bf16.mxu0 0
    %611 = vmatmul.mubr.bf16.gmra.mrb[0].mxu0 %v349
    %v612 = vpop.f32.mrb[0].mxu0
    %v613 = vadd.f32 %v180, %v612
    %v614 = vpop.f32.mrb[0].mxu0
    %v615 = vpop.f32.mrb[0].mxu0
    %v616 = vadd.f32 %v180, %v615
    %v617 = vpop.f32.mrb[0].mxu0
    %618 = vmatprep.mubr.bf16.mxu0 0
    %619 = vmatmul.mubr.bf16.gmra.mrb[0].mxu0 %v350
    %v620 = vpop.f32.mrb[0].mxu0
    %v621 = vadd.f32 %v180, %v620
    %v622 = vpop.f32.mrb[0].mxu0
    %v623 = vpop.f32.mrb[0].mxu0
    %v624 = vadd.f32 %v180, %v623
    %v625 = vpop.f32.mrb[0].mxu0
    %626 = vmatprep.mubr.bf16.mxu0 0
    %627 = vmatmul.mubr.bf16.gmra.mrb[0].mxu0 %v351
    %v628 = vpop.f32.mrb[0].mxu0
    %v629 = vadd.f32 %v180, %v628
    %v630 = vpop.f32.mrb[0].mxu0
    %v631 = vpop.f32.mrb[0].mxu0
    %v632 = vadd.f32 %v180, %v631
    %v633 = vpop.f32.mrb[0].mxu0
    %634 = vmatprep.mubr.bf16.mxu0 0
    %635 = vmatmul.mubr.bf16.gmra.mrb[0].mxu0 %v352
    %v636 = vpop.f32.mrb[0].mxu0
    %v637 = vadd.f32 %v180, %v636
    %v638 = vpop.f32.mrb[0].mxu0
    %v639 = vpop.f32.mrb[0].mxu0
    %v640 = vadd.f32 %v180, %v639
    %v641 = vpop.f32.mrb[0].mxu0
    %642 = vmatprep.mubr.bf16.mxu0 0
    %643 = vmatmul.mubr.bf16.gmra.mrb[0].mxu0 %v353
    %v644 = vpop.f32.mrb[0].mxu0
    %v645 = vadd.f32 %v180, %v644
    %v646 = vpop.f32.mrb[0].mxu0
    %v647 = vpop.f32.mrb[0].mxu0
    %v648 = vadd.f32 %v180, %v647
    %v649 = vpop.f32.mrb[0].mxu0
    %650 = vmatprep.mubr.bf16.mxu0 0
    %651 = vmatmul.mubr.bf16.gmra.mrb[0].mxu0 %v354
    %v652 = vpop.f32.mrb[0].mxu0
    %v653 = vadd.f32 %v180, %v652
    %v654 = vpop.f32.mrb[0].mxu0
    %v655 = vpop.f32.mrb[0].mxu0
    %v656 = vadd.f32 %v180, %v655
    %v657 = vpop.f32.mrb[0].mxu0
    %658 = vmatprep.mubr.bf16.mxu0 0
    %659 = vmatmul.mubr.bf16.gmra.mrb[0].mxu0 %v355
    %v660 = vpop.f32.mrb[0].mxu0
    %v661 = vadd.f32 %v180, %v660
    %v662 = vpop.f32.mrb[0].mxu0
    %v663 = vpop.f32.mrb[0].mxu0
    %v664 = vadd.f32 %v180, %v663
    %v665 = vpop.f32.mrb[0].mxu0
    %666 = vmatprep.mubr.bf16.mxu0 0
    %667 = vmatmul.mubr.bf16.gmra.mrb[0].mxu0 %v356
    %v668 = vpop.f32.mrb[0].mxu0
    %v669 = vadd.f32 %v180, %v668
    %v670 = vpop.f32.mrb[0].mxu0
    %v671 = vpop.f32.mrb[0].mxu0
    %v672 = vadd.f32 %v180, %v671
    %v673 = vpop.f32.mrb[0].mxu0
    %674 = vmatprep.mubr.bf16.mxu0 0
    %675 = vmatmul.mubr.bf16.gmra.mrb[0].mxu0 %v357
    %v676 = vpop.f32.mrb[0].mxu0
    %v677 = vadd.f32 %v180, %v676
    %v678 = vpop.f32.mrb[0].mxu0
    %v679 = vpop.f32.mrb[0].mxu0
    %v680 = vadd.f32 %v180, %v679
    %v681 = vpop.f32.mrb[0].mxu0
    %682 = vmatprep.mubr.bf16.mxu0 0
    %683 = vmatmul.mubr.bf16.gmra.mrb[0].mxu0 %v358
    %v684 = vpop.f32.mrb[0].mxu0
    %v685 = vadd.f32 %v180, %v684
    %v686 = vpop.f32.mrb[0].mxu0
    %v687 = vpop.f32.mrb[0].mxu0
    %v688 = vadd.f32 %v180, %v687
    %v689 = vpop.f32.mrb[0].mxu0
    %690 = vmatprep.mubr.bf16.mxu0 0
    %691 = vmatmul.mubr.bf16.gmra.mrb[0].mxu0 %v359
    %v692 = vpop.f32.mrb[0].mxu0
    %v693 = vadd.f32 %v180, %v692
    %v694 = vpop.f32.mrb[0].mxu0
    %v695 = vpop.f32.mrb[0].mxu0
    %v696 = vadd.f32 %v180, %v695
    %v697 = vpop.f32.mrb[0].mxu0
    %698 = vmatprep.mubr.bf16.mxu0 0
    %699 = vmatmul.mubr.bf16.gmra.mrb[0].mxu0 %v360
    %v700 = vpop.f32.mrb[0].mxu0
    %v701 = vadd.f32 %v180, %v700
    %v702 = vpop.f32.mrb[0].mxu0
    %v703 = vpop.f32.mrb[0].mxu0
    %v704 = vadd.f32 %v180, %v703
    %v705 = vpop.f32.mrb[0].mxu0
    %706 = vmatprep.mubr.bf16.mxu0 0
    %707 = vmatmul.mubr.bf16.gmra.mrb[0].mxu0 %v361
    %v708 = vpop.f32.mrb[0].mxu0
    %v709 = vadd.f32 %v180, %v708
    %v710 = vpop.f32.mrb[0].mxu0
    %v711 = vpop.f32.mrb[0].mxu0
    %v712 = vadd.f32 %v180, %v711
    %v713 = vpop.f32.mrb[0].mxu0
    %714 = vmatprep.mubr.bf16.mxu0 0
    %715 = vmatmul.mubr.bf16.gmra.mrb[0].mxu0 %v362
    %v716 = vpop.f32.mrb[0].mxu0
    %v717 = vadd.f32 %v180, %v716
    %v718 = vpop.f32.mrb[0].mxu0
    %v719 = vpop.f32.mrb[0].mxu0
    %v720 = vadd.f32 %v180, %v719
    %v721 = vpop.f32.mrb[0].mxu0
    %722 = vmatprep.mubr.bf16.mxu0 0
    %723 = vmatmul.mubr.bf16.gmra.mrb[0].mxu0 %v363
    %v724 = vpop.f32.mrb[0].mxu0
    %v725 = vadd.f32 %v180, %v724
    %v726 = vpop.f32.mrb[0].mxu0
    %v727 = vpop.f32.mrb[0].mxu0
    %v728 = vadd.f32 %v180, %v727
    %v729 = vpop.f32.mrb[0].mxu0
    %730 = vmatprep.mubr.bf16.mxu0 0
    %731 = vmatmul.mubr.bf16.gmra.mrb[0].mxu0 %v364
    %v732 = vpop.f32.mrb[0].mxu0
    %v733 = vadd.f32 %v180, %v732
    %v734 = vpop.f32.mrb[0].mxu0
    %v735 = vpop.f32.mrb[0].mxu0
    %v736 = vadd.f32 %v180, %v735
    %v737 = vpop.f32.mrb[0].mxu0
    %738 = vmatprep.mubr.bf16.mxu0 0
    %739 = vmatmul.mubr.bf16.gmra.mrb[0].mxu0 %v365
    %v740 = vpop.f32.mrb[0].mxu0
    %v741 = vadd.f32 %v180, %v740
    %v742 = vpop.f32.mrb[0].mxu0
    %v743 = vpop.f32.mrb[0].mxu0
    %v744 = vadd.f32 %v180, %v743
    %v745 = vpop.f32.mrb[0].mxu0
    %746 = vmatprep.mubr.bf16.mxu0 0
    %747 = vmatmul.mubr.bf16.gmra.mrb[0].mxu0 %v366
    %v748 = vpop.f32.mrb[0].mxu0
    %v749 = vadd.f32 %v180, %v748
    %v750 = vpop.f32.mrb[0].mxu0
    %v751 = vpop.f32.mrb[0].mxu0
    %v752 = vadd.f32 %v180, %v751
    %v753 = vpop.f32.mrb[0].mxu0
    %754 = vmatprep.mubr.bf16.mxu0 0
    %755 = vmatmul.mubr.bf16.gmra.mrb[0].mxu0 %v367
    %v756 = vpop.f32.mrb[0].mxu0
    %v757 = vadd.f32 %v180, %v756
    %v758 = vpop.f32.mrb[0].mxu0
    %v759 = vpop.f32.mrb[0].mxu0
    %v760 = vadd.f32 %v180, %v759
    %v761 = vpop.f32.mrb[0].mxu0
    %762 = vmatprep.mubr.bf16.mxu0 0
    %763 = vmatmul.mubr.bf16.gmra.mrb[0].mxu0 %v368
    %v764 = vpop.f32.mrb[0].mxu0
    %v765 = vadd.f32 %v180, %v764
    %v766 = vpop.f32.mrb[0].mxu0
    %v767 = vpop.f32.mrb[0].mxu0
    %v768 = vadd.f32 %v180, %v767
    %v769 = vpop.f32.mrb[0].mxu0
    %770 = vmatprep.mubr.bf16.mxu0 0
    %771 = vmatmul.mubr.bf16.gmra.mrb[0].mxu0 %v369
    %v772 = vpop.f32.mrb[0].mxu0
    %v773 = vadd.f32 %v180, %v772
    %v774 = vpop.f32.mrb[0].mxu0
    %v775 = vpop.f32.mrb[0].mxu0
    %v776 = vadd.f32 %v180, %v775
    %v777 = vpop.f32.mrb[0].mxu0
    %778 = vmatprep.mubr.bf16.mxu0 0
    %779 = vmatmul.mubr.bf16.gmra.mrb[0].mxu0 %v370
    %v780 = vpop.f32.mrb[0].mxu0
    %v781 = vadd.f32 %v180, %v780
    %v782 = vpop.f32.mrb[0].mxu0
    %v783 = vpop.f32.mrb[0].mxu0
    %v784 = vadd.f32 %v180, %v783
    %v785 = vpop.f32.mrb[0].mxu0
    %786 = vmatprep.mubr.bf16.mxu0 0
    %787 = vmatmul.mubr.bf16.gmra.mrb[0].mxu0 %v371
    %v788 = vpop.f32.mrb[0].mxu0
    %v789 = vadd.f32 %v180, %v788
    %v790 = vpop.f32.mrb[0].mxu0
    %v791 = vpop.f32.mrb[0].mxu0
    %v792 = vadd.f32 %v180, %v791
    %v793 = vpop.f32.mrb[0].mxu0
    %794 = vdwg.mxu0
    %v795 = vmax.f32 %v493, 0.0
    %v796 = vmax.f32 %v496, 0.0
    %v797 = vmax.f32 %v501, 0.0
    %v798 = vmax.f32 %v504, 0.0
    %v799 = vmax.f32 %v509, 0.0
    %v800 = vmax.f32 %v512, 0.0
    %v801 = vmax.f32 %v517, 0.0
    %v802 = vmax.f32 %v520, 0.0
    %v803 = vmax.f32 %v525, 0.0
    %v804 = vmax.f32 %v528, 0.0
    %v805 = vmax.f32 %v533, 0.0
    %v806 = vmax.f32 %v536, 0.0
    %v807 = vmax.f32 %v541, 0.0
    %v808 = vmax.f32 %v544, 0.0
    %v809 = vmax.f32 %v549, 0.0
    %v810 = vmax.f32 %v552, 0.0
    %v811 = vmax.f32 %v557, 0.0
    %v812 = vmax.f32 %v560, 0.0
    %v813 = vmax.f32 %v565, 0.0
    %v814 = vmax.f32 %v568, 0.0
    %v815 = vmax.f32 %v573, 0.0
    %v816 = vmax.f32 %v576, 0.0
    %v817 = vmax.f32 %v581, 0.0
    %v818 = vmax.f32 %v584, 0.0
    %v819 = vmax.f32 %v589, 0.0
    %v820 = vmax.f32 %v592, 0.0
    %v821 = vmax.f32 %v597, 0.0
    %v822 = vmax.f32 %v600, 0.0
    %v823 = vmax.f32 %v605, 0.0
    %v824 = vmax.f32 %v608, 0.0
    %v825 = vmax.f32 %v613, 0.0
    %v826 = vmax.f32 %v616, 0.0
    %v827 = vmax.f32 %v621, 0.0
    %v828 = vmax.f32 %v624, 0.0
    %v829 = vmax.f32 %v629, 0.0
    %v830 = vmax.f32 %v632, 0.0
    %v831 = vmax.f32 %v637, 0.0
    %v832 = vmax.f32 %v640, 0.0
    %v833 = vmax.f32 %v645, 0.0
    %v834 = vmax.f32 %v648, 0.0
    %v835 = vmax.f32 %v653, 0.0
    %v836 = vmax.f32 %v656, 0.0
    %v837 = vmax.f32 %v661, 0.0
    %v838 = vmax.f32 %v664, 0.0
    %v839 = vmax.f32 %v669, 0.0
    %v840 = vmax.f32 %v672, 0.0
    %v841 = vmax.f32 %v677, 0.0
    %v842 = vmax.f32 %v680, 0.0
    %v843 = vmax.f32 %v685, 0.0
    %v844 = vmax.f32 %v688, 0.0
    %v845 = vmax.f32 %v693, 0.0
    %v846 = vmax.f32 %v696, 0.0
    %v847 = vmax.f32 %v701, 0.0
    %v848 = vmax.f32 %v704, 0.0
    %v849 = vmax.f32 %v709, 0.0
    %v850 = vmax.f32 %v712, 0.0
    %v851 = vmax.f32 %v717, 0.0
    %v852 = vmax.f32 %v720, 0.0
    %v853 = vmax.f32 %v725, 0.0
    %v854 = vmax.f32 %v728, 0.0
    %v855 = vmax.f32 %v733, 0.0
    %v856 = vmax.f32 %v736, 0.0
    %v857 = vmax.f32 %v741, 0.0
    %v858 = vmax.f32 %v744, 0.0
    %v859 = vmax.f32 %v749, 0.0
    %v860 = vmax.f32 %v752, 0.0
    %v861 = vmax.f32 %v757, 0.0
    %v862 = vmax.f32 %v760, 0.0
    %v863 = vmax.f32 %v765, 0.0
    %v864 = vmax.f32 %v768, 0.0
    %v865 = vmax.f32 %v773, 0.0
    %v866 = vmax.f32 %v776, 0.0
    %v867 = vmax.f32 %v781, 0.0
    %v868 = vmax.f32 %v784, 0.0
    %v869 = vmax.f32 %v789, 0.0
    %v870 = vmax.f32 %v792, 0.0
    %v871 = vpack.c.bf16 %v796, %v795
    %v872 = vpack.c.bf16 %v798, %v797
    %v873 = vpack.c.bf16 %v800, %v799
    %v874 = vpack.c.bf16 %v802, %v801
    %v875 = vpack.c.bf16 %v804, %v803
    %v876 = vpack.c.bf16 %v806, %v805
    %v877 = vpack.c.bf16 %v808, %v807
    %v878 = vpack.c.bf16 %v810, %v809
    %v879 = vpack.c.bf16 %v812, %v811
    %v880 = vpack.c.bf16 %v814, %v813
    %v881 = vpack.c.bf16 %v816, %v815
    %v882 = vpack.c.bf16 %v818, %v817
    %v883 = vpack.c.bf16 %v820, %v819
    %v884 = vpack.c.bf16 %v822, %v821
    %v885 = vpack.c.bf16 %v824, %v823
    %v886 = vpack.c.bf16 %v826, %v825
    %v887 = vpack.c.bf16 %v828, %v827
    %v888 = vpack.c.bf16 %v830, %v829
    %v889 = vpack.c.bf16 %v832, %v831
    %v890 = vpack.c.bf16 %v834, %v833
    %v891 = vpack.c.bf16 %v836, %v835
    %v892 = vpack.c.bf16 %v838, %v837
    %v893 = vpack.c.bf16 %v840, %v839
    %v894 = vpack.c.bf16 %v842, %v841
    %v895 = vpack.c.bf16 %v844, %v843
    %v896 = vpack.c.bf16 %v846, %v845
    %v897 = vpack.c.bf16 %v848, %v847
    %v898 = vpack.c.bf16 %v850, %v849
    %v899 = vpack.c.bf16 %v852, %v851
    %v900 = vpack.c.bf16 %v854, %v853
    %v901 = vpack.c.bf16 %v856, %v855
    %v902 = vpack.c.bf16 %v858, %v857
    %v903 = vpack.c.bf16 %v860, %v859
    %v904 = vpack.c.bf16 %v862, %v861
    %v905 = vpack.c.bf16 %v864, %v863
    %v906 = vpack.c.bf16 %v866, %v865
    %v907 = vpack.c.bf16 %v868, %v867
    %v908 = vpack.c.bf16 %v870, %v869
    %v909 = vld [vmem:[#allocation7] sm:$0xf]
    %v910 = vld [vmem:[#allocation7 + $0x4] sm:$0xf]
    %v911 = vld [vmem:[#allocation7 + $0x8] sm:$0xf]
    %v912 = vld [vmem:[#allocation7 + $0xc] sm:$0xf]
    %v913 = vld [vmem:[#allocation7 + $0x10] sm:$0xf]
    %v914 = vld [vmem:[#allocation7 + $0x14] sm:$0xf]
    %v915 = vld [vmem:[#allocation7 + $0x18] sm:$0xf]
    %v916 = vld [vmem:[#allocation7 + $0x1c] sm:$0xf]
    %v917 = vld [vmem:[#allocation7 + $0x20] sm:$0xf]
    %v918 = vld [vmem:[#allocation7 + $0x24] sm:$0xf]
    %v919 = vld [vmem:[#allocation7 + $0x28] sm:$0xf]
    %v920 = vld [vmem:[#allocation7 + $0x2c] sm:$0xf]
    %v921 = vld [vmem:[#allocation7 + $0x30] sm:$0xf]
    %v922 = vld [vmem:[#allocation7 + $0x34] sm:$0xf]
    %v923 = vld [vmem:[#allocation7 + $0x38] sm:$0xf]
    %v924 = vld [vmem:[#allocation7 + $0x3c] sm:$0xf]
    %v925 = vld [vmem:[%s4] sm:$0x1]
    %v927 = vlaneseq
    %v928 = vshrl.u32 %v927, 7
    %v929 = vsub.s32 0, %v928
    %v930 = vrot.slane %v925, %v929
    %v948 = vunpack.c.l.b16 %v909
    %v949 = vunpack.c.l.b16 %v910
    %v950 = vunpack.c.l.b16 %v911
    %v951 = vunpack.c.l.b16 %v912
    %v952 = vunpack.c.l.b16 %v913
    %v953 = vunpack.c.l.b16 %v914
    %v954 = vunpack.c.l.b16 %v915
    %v955 = vunpack.c.l.b16 %v916
    %v956 = vunpack.c.l.b16 %v917
    %v957 = vunpack.c.l.b16 %v918
    %v958 = vunpack.c.l.b16 %v919
    %v959 = vunpack.c.l.b16 %v920
    %v960 = vunpack.c.l.b16 %v921
    %v961 = vunpack.c.l.b16 %v922
    %v962 = vunpack.c.l.b16 %v923
    %v963 = vunpack.c.l.b16 %v924
    %v964 = vpack.c.b16 %v949, %v948
    %v965 = vpack.c.b16 %v951, %v950
    %v966 = vpack.c.b16 %v953, %v952
    %v967 = vpack.c.b16 %v955, %v954
    %v968 = vpack.c.b16 %v957, %v956
    %v969 = vpack.c.b16 %v959, %v958
    %v970 = vpack.c.b16 %v961, %v960
    %v971 = vpack.c.b16 %v963, %v962
    %980 = vmatprep.subr.bf16.mxu0 0
    %981 = vmatpush1.bf16.msra.mxu0 %v964
    %982 = vmatprep.subr.bf16.mxu0 0
    %983 = vmatpush1.bf16.msra.mxu0 %v965
    %984 = vmatprep.subr.bf16.mxu0 0
    %985 = vmatpush1.bf16.msra.mxu0 %v966
    %986 = vmatprep.subr.bf16.mxu0 0
    %987 = vmatpush1.bf16.msra.mxu0 %v967
    %988 = vmatprep.subr.bf16.mxu0 0
    %989 = vmatpush1.bf16.msra.mxu0 %v968
    %990 = vmatprep.subr.bf16.mxu0 0
    %991 = vmatpush1.bf16.msra.mxu0 %v969
    %992 = vmatprep.subr.bf16.mxu0 0
    %993 = vmatpush1.bf16.msra.mxu0 %v970
    %994 = vmatprep.subr.bf16.mxu0 0
    %995 = vmatpush1.bf16.msra.mxu0 %v971
    %996 = vmatprep.subr.bf16.mxu0 0
    %997 = vmatpush1.bf16.msra.mxu0 0
    %998 = vmatprep.subr.bf16.mxu0 0
    %999 = vmatpush1.bf16.msra.mxu0 0
    %1000 = vmatprep.subr.bf16.mxu0 0
    %1001 = vmatpush1.bf16.msra.mxu0 0
    %1002 = vmatprep.subr.bf16.mxu0 0
    %1003 = vmatpush1.bf16.msra.mxu0 0
    %1004 = vmatprep.subr.bf16.mxu0 0
    %1005 = vmatpush1.bf16.msra.mxu0 0
    %1006 = vmatprep.subr.bf16.mxu0 0
    %1007 = vmatpush1.bf16.msra.mxu0 0
    %1008 = vmatprep.subr.bf16.mxu0 0
    %1009 = vmatpush1.bf16.msra.mxu0 0
    %1010 = vmatprep.subr.bf16.mxu0 0
    %1011 = vmatpush1.bf16.msra.mxu0 0
    %1012 = vmatprep.mubr.bf16.mxu0 0
    %1013 = vmatmul.mubr.bf16.gmra.mrb[0].mxu0 %v871
    %v1014 = vpop.f32.mrb[0].mxu0
    %v1015 = vadd.f32 %v930, %v1014
    %v1016 = vpop.f32.mrb[0].mxu0
    %v1017 = vpop.f32.mrb[0].mxu0
    %v1018 = vadd.f32 %v930, %v1017
    %v1019 = vpop.f32.mrb[0].mxu0
    %1020 = vmatprep.mubr.bf16.mxu0 0
    %1021 = vmatmul.mubr.bf16.gmra.mrb[0].mxu0 %v872
    %v1022 = vpop.f32.mrb[0].mxu0
    %v1023 = vadd.f32 %v930, %v1022
    %v1024 = vpop.f32.mrb[0].mxu0
    %v1025 = vpop.f32.mrb[0].mxu0
    %v1026 = vadd.f32 %v930, %v1025
    %v1027 = vpop.f32.mrb[0].mxu0
    %1028 = vmatprep.mubr.bf16.mxu0 0
    %1029 = vmatmul.mubr.bf16.gmra.mrb[0].mxu0 %v873
    %v1030 = vpop.f32.mrb[0].mxu0
    %v1031 = vadd.f32 %v930, %v1030
    %v1032 = vpop.f32.mrb[0].mxu0
    %v1033 = vpop.f32.mrb[0].mxu0
    %v1034 = vadd.f32 %v930, %v1033
    %v1035 = vpop.f32.mrb[0].mxu0
    %1036 = vmatprep.mubr.bf16.mxu0 0
    %1037 = vmatmul.mubr.bf16.gmra.mrb[0].mxu0 %v874
    %v1038 = vpop.f32.mrb[0].mxu0
    %v1039 = vadd.f32 %v930, %v1038
    %v1040 = vpop.f32.mrb[0].mxu0
    %v1041 = vpop.f32.mrb[0].mxu0
    %v1042 = vadd.f32 %v930, %v1041
    %v1043 = vpop.f32.mrb[0].mxu0
    %1044 = vmatprep.mubr.bf16.mxu0 0
    %1045 = vmatmul.mubr.bf16.gmra.mrb[0].mxu0 %v875
    %v1046 = vpop.f32.mrb[0].mxu0
    %v1047 = vadd.f32 %v930, %v1046
    %v1048 = vpop.f32.mrb[0].mxu0
    %v1049 = vpop.f32.mrb[0].mxu0
    %v1050 = vadd.f32 %v930, %v1049
    %v1051 = vpop.f32.mrb[0].mxu0
    %1052 = vmatprep.mubr.bf16.mxu0 0
    %1053 = vmatmul.mubr.bf16.gmra.mrb[0].mxu0 %v876
    %v1054 = vpop.f32.mrb[0].mxu0
    %v1055 = vadd.f32 %v930, %v1054
    %v1056 = vpop.f32.mrb[0].mxu0
    %v1057 = vpop.f32.mrb[0].mxu0
    %v1058 = vadd.f32 %v930, %v1057
    %v1059 = vpop.f32.mrb[0].mxu0
    %1060 = vmatprep.mubr.bf16.mxu0 0
    %1061 = vmatmul.mubr.bf16.gmra.mrb[0].mxu0 %v877
    %v1062 = vpop.f32.mrb[0].mxu0
    %v1063 = vadd.f32 %v930, %v1062
    %v1064 = vpop.f32.mrb[0].mxu0
    %v1065 = vpop.f32.mrb[0].mxu0
    %v1066 = vadd.f32 %v930, %v1065
    %v1067 = vpop.f32.mrb[0].mxu0
    %1068 = vmatprep.mubr.bf16.mxu0 0
    %1069 = vmatmul.mubr.bf16.gmra.mrb[0].mxu0 %v878
    %v1070 = vpop.f32.mrb[0].mxu0
    %v1071 = vadd.f32 %v930, %v1070
    %v1072 = vpop.f32.mrb[0].mxu0
    %v1073 = vpop.f32.mrb[0].mxu0
    %v1074 = vadd.f32 %v930, %v1073
    %v1075 = vpop.f32.mrb[0].mxu0
    %1076 = vmatprep.mubr.bf16.mxu0 0
    %1077 = vmatmul.mubr.bf16.gmra.mrb[0].mxu0 %v879
    %v1078 = vpop.f32.mrb[0].mxu0
    %v1079 = vadd.f32 %v930, %v1078
    %v1080 = vpop.f32.mrb[0].mxu0
    %v1081 = vpop.f32.mrb[0].mxu0
    %v1082 = vadd.f32 %v930, %v1081
    %v1083 = vpop.f32.mrb[0].mxu0
    %1084 = vmatprep.mubr.bf16.mxu0 0
    %1085 = vmatmul.mubr.bf16.gmra.mrb[0].mxu0 %v880
    %v1086 = vpop.f32.mrb[0].mxu0
    %v1087 = vadd.f32 %v930, %v1086
    %v1088 = vpop.f32.mrb[0].mxu0
    %v1089 = vpop.f32.mrb[0].mxu0
    %v1090 = vadd.f32 %v930, %v1089
    %v1091 = vpop.f32.mrb[0].mxu0
    %1092 = vmatprep.mubr.bf16.mxu0 0
    %1093 = vmatmul.mubr.bf16.gmra.mrb[0].mxu0 %v881
    %v1094 = vpop.f32.mrb[0].mxu0
    %v1095 = vadd.f32 %v930, %v1094
    %v1096 = vpop.f32.mrb[0].mxu0
    %v1097 = vpop.f32.mrb[0].mxu0
    %v1098 = vadd.f32 %v930, %v1097
    %v1099 = vpop.f32.mrb[0].mxu0
    %1100 = vmatprep.mubr.bf16.mxu0 0
    %1101 = vmatmul.mubr.bf16.gmra.mrb[0].mxu0 %v882
    %v1102 = vpop.f32.mrb[0].mxu0
    %v1103 = vadd.f32 %v930, %v1102
    %v1104 = vpop.f32.mrb[0].mxu0
    %v1105 = vpop.f32.mrb[0].mxu0
    %v1106 = vadd.f32 %v930, %v1105
    %v1107 = vpop.f32.mrb[0].mxu0
    %1108 = vmatprep.mubr.bf16.mxu0 0
    %1109 = vmatmul.mubr.bf16.gmra.mrb[0].mxu0 %v883
    %v1110 = vpop.f32.mrb[0].mxu0
    %v1111 = vadd.f32 %v930, %v1110
    %v1112 = vpop.f32.mrb[0].mxu0
    %v1113 = vpop.f32.mrb[0].mxu0
    %v1114 = vadd.f32 %v930, %v1113
    %v1115 = vpop.f32.mrb[0].mxu0
    %1116 = vmatprep.mubr.bf16.mxu0 0
    %1117 = vmatmul.mubr.bf16.gmra.mrb[0].mxu0 %v884
    %v1118 = vpop.f32.mrb[0].mxu0
    %v1119 = vadd.f32 %v930, %v1118
    %v1120 = vpop.f32.mrb[0].mxu0
    %v1121 = vpop.f32.mrb[0].mxu0
    %v1122 = vadd.f32 %v930, %v1121
    %v1123 = vpop.f32.mrb[0].mxu0
    %1124 = vmatprep.mubr.bf16.mxu0 0
    %1125 = vmatmul.mubr.bf16.gmra.mrb[0].mxu0 %v885
    %v1126 = vpop.f32.mrb[0].mxu0
    %v1127 = vadd.f32 %v930, %v1126
    %v1128 = vpop.f32.mrb[0].mxu0
    %v1129 = vpop.f32.mrb[0].mxu0
    %v1130 = vadd.f32 %v930, %v1129
    %v1131 = vpop.f32.mrb[0].mxu0
    %1132 = vmatprep.mubr.bf16.mxu0 0
    %1133 = vmatmul.mubr.bf16.gmra.mrb[0].mxu0 %v886
    %v1134 = vpop.f32.mrb[0].mxu0
    %v1135 = vadd.f32 %v930, %v1134
    %v1136 = vpop.f32.mrb[0].mxu0
    %v1137 = vpop.f32.mrb[0].mxu0
    %v1138 = vadd.f32 %v930, %v1137
    %v1139 = vpop.f32.mrb[0].mxu0
    %1140 = vmatprep.mubr.bf16.mxu0 0
    %1141 = vmatmul.mubr.bf16.gmra.mrb[0].mxu0 %v887
    %v1142 = vpop.f32.mrb[0].mxu0
    %v1143 = vadd.f32 %v930, %v1142
    %v1144 = vpop.f32.mrb[0].mxu0
    %v1145 = vpop.f32.mrb[0].mxu0
    %v1146 = vadd.f32 %v930, %v1145
    %v1147 = vpop.f32.mrb[0].mxu0
    %1148 = vmatprep.mubr.bf16.mxu0 0
    %1149 = vmatmul.mubr.bf16.gmra.mrb[0].mxu0 %v888
    %v1150 = vpop.f32.mrb[0].mxu0
    %v1151 = vadd.f32 %v930, %v1150
    %v1152 = vpop.f32.mrb[0].mxu0
    %v1153 = vpop.f32.mrb[0].mxu0
    %v1154 = vadd.f32 %v930, %v1153
    %v1155 = vpop.f32.mrb[0].mxu0
    %1156 = vmatprep.mubr.bf16.mxu0 0
    %1157 = vmatmul.mubr.bf16.gmra.mrb[0].mxu0 %v889
    %v1158 = vpop.f32.mrb[0].mxu0
    %v1159 = vadd.f32 %v930, %v1158
    %v1160 = vpop.f32.mrb[0].mxu0
    %v1161 = vpop.f32.mrb[0].mxu0
    %v1162 = vadd.f32 %v930, %v1161
    %v1163 = vpop.f32.mrb[0].mxu0
    %1164 = vmatprep.mubr.bf16.mxu0 0
    %1165 = vmatmul.mubr.bf16.gmra.mrb[0].mxu0 %v890
    %v1166 = vpop.f32.mrb[0].mxu0
    %v1167 = vadd.f32 %v930, %v1166
    %v1168 = vpop.f32.mrb[0].mxu0
    %v1169 = vpop.f32.mrb[0].mxu0
    %v1170 = vadd.f32 %v930, %v1169
    %v1171 = vpop.f32.mrb[0].mxu0
    %1172 = vmatprep.mubr.bf16.mxu0 0
    %1173 = vmatmul.mubr.bf16.gmra.mrb[0].mxu0 %v891
    %v1174 = vpop.f32.mrb[0].mxu0
    %v1175 = vadd.f32 %v930, %v1174
    %v1176 = vpop.f32.mrb[0].mxu0
    %v1177 = vpop.f32.mrb[0].mxu0
    %v1178 = vadd.f32 %v930, %v1177
    %v1179 = vpop.f32.mrb[0].mxu0
    %1180 = vmatprep.mubr.bf16.mxu0 0
    %1181 = vmatmul.mubr.bf16.gmra.mrb[0].mxu0 %v892
    %v1182 = vpop.f32.mrb[0].mxu0
    %v1183 = vadd.f32 %v930, %v1182
    %v1184 = vpop.f32.mrb[0].mxu0
    %v1185 = vpop.f32.mrb[0].mxu0
    %v1186 = vadd.f32 %v930, %v1185
    %v1187 = vpop.f32.mrb[0].mxu0
    %1188 = vmatprep.mubr.bf16.mxu0 0
    %1189 = vmatmul.mubr.bf16.gmra.mrb[0].mxu0 %v893
    %v1190 = vpop.f32.mrb[0].mxu0
    %v1191 = vadd.f32 %v930, %v1190
    %v1192 = vpop.f32.mrb[0].mxu0
    %v1193 = vpop.f32.mrb[0].mxu0
    %v1194 = vadd.f32 %v930, %v1193
    %v1195 = vpop.f32.mrb[0].mxu0
    %1196 = vmatprep.mubr.bf16.mxu0 0
    %1197 = vmatmul.mubr.bf16.gmra.mrb[0].mxu0 %v894
    %v1198 = vpop.f32.mrb[0].mxu0
    %v1199 = vadd.f32 %v930, %v1198
    %v1200 = vpop.f32.mrb[0].mxu0
    %v1201 = vpop.f32.mrb[0].mxu0
    %v1202 = vadd.f32 %v930, %v1201
    %v1203 = vpop.f32.mrb[0].mxu0
    %1204 = vmatprep.mubr.bf16.mxu0 0
    %1205 = vmatmul.mubr.bf16.gmra.mrb[0].mxu0 %v895
    %v1206 = vpop.f32.mrb[0].mxu0
    %v1207 = vadd.f32 %v930, %v1206
    %v1208 = vpop.f32.mrb[0].mxu0
    %v1209 = vpop.f32.mrb[0].mxu0
    %v1210 = vadd.f32 %v930, %v1209
    %v1211 = vpop.f32.mrb[0].mxu0
    %1212 = vmatprep.mubr.bf16.mxu0 0
    %1213 = vmatmul.mubr.bf16.gmra.mrb[0].mxu0 %v896
    %v1214 = vpop.f32.mrb[0].mxu0
    %v1215 = vadd.f32 %v930, %v1214
    %v1216 = vpop.f32.mrb[0].mxu0
    %v1217 = vpop.f32.mrb[0].mxu0
    %v1218 = vadd.f32 %v930, %v1217
    %v1219 = vpop.f32.mrb[0].mxu0
    %1220 = vmatprep.mubr.bf16.mxu0 0
    %1221 = vmatmul.mubr.bf16.gmra.mrb[0].mxu0 %v897
    %v1222 = vpop.f32.mrb[0].mxu0
    %v1223 = vadd.f32 %v930, %v1222
    %v1224 = vpop.f32.mrb[0].mxu0
    %v1225 = vpop.f32.mrb[0].mxu0
    %v1226 = vadd.f32 %v930, %v1225
    %v1227 = vpop.f32.mrb[0].mxu0
    %1228 = vmatprep.mubr.bf16.mxu0 0
    %1229 = vmatmul.mubr.bf16.gmra.mrb[0].mxu0 %v898
    %v1230 = vpop.f32.mrb[0].mxu0
    %v1231 = vadd.f32 %v930, %v1230
    %v1232 = vpop.f32.mrb[0].mxu0
    %v1233 = vpop.f32.mrb[0].mxu0
    %v1234 = vadd.f32 %v930, %v1233
    %v1235 = vpop.f32.mrb[0].mxu0
    %1236 = vmatprep.mubr.bf16.mxu0 0
    %1237 = vmatmul.mubr.bf16.gmra.mrb[0].mxu0 %v899
    %v1238 = vpop.f32.mrb[0].mxu0
    %v1239 = vadd.f32 %v930, %v1238
    %v1240 = vpop.f32.mrb[0].mxu0
    %v1241 = vpop.f32.mrb[0].mxu0
    %v1242 = vadd.f32 %v930, %v1241
    %v1243 = vpop.f32.mrb[0].mxu0
    %1244 = vmatprep.mubr.bf16.mxu0 0
    %1245 = vmatmul.mubr.bf16.gmra.mrb[0].mxu0 %v900
    %v1246 = vpop.f32.mrb[0].mxu0
    %v1247 = vadd.f32 %v930, %v1246
    %v1248 = vpop.f32.mrb[0].mxu0
    %v1249 = vpop.f32.mrb[0].mxu0
    %v1250 = vadd.f32 %v930, %v1249
    %v1251 = vpop.f32.mrb[0].mxu0
    %1252 = vmatprep.mubr.bf16.mxu0 0
    %1253 = vmatmul.mubr.bf16.gmra.mrb[0].mxu0 %v901
    %v1254 = vpop.f32.mrb[0].mxu0
    %v1255 = vadd.f32 %v930, %v1254
    %v1256 = vpop.f32.mrb[0].mxu0
    %v1257 = vpop.f32.mrb[0].mxu0
    %v1258 = vadd.f32 %v930, %v1257
    %v1259 = vpop.f32.mrb[0].mxu0
    %1260 = vmatprep.mubr.bf16.mxu0 0
    %1261 = vmatmul.mubr.bf16.gmra.mrb[0].mxu0 %v902
    %v1262 = vpop.f32.mrb[0].mxu0
    %v1263 = vadd.f32 %v930, %v1262
    %v1264 = vpop.f32.mrb[0].mxu0
    %v1265 = vpop.f32.mrb[0].mxu0
    %v1266 = vadd.f32 %v930, %v1265
    %v1267 = vpop.f32.mrb[0].mxu0
    %1268 = vmatprep.mubr.bf16.mxu0 0
    %1269 = vmatmul.mubr.bf16.gmra.mrb[0].mxu0 %v903
    %v1270 = vpop.f32.mrb[0].mxu0
    %v1271 = vadd.f32 %v930, %v1270
    %v1272 = vpop.f32.mrb[0].mxu0
    %v1273 = vpop.f32.mrb[0].mxu0
    %v1274 = vadd.f32 %v930, %v1273
    %v1275 = vpop.f32.mrb[0].mxu0
    %1276 = vmatprep.mubr.bf16.mxu0 0
    %1277 = vmatmul.mubr.bf16.gmra.mrb[0].mxu0 %v904
    %v1278 = vpop.f32.mrb[0].mxu0
    %v1279 = vadd.f32 %v930, %v1278
    %v1280 = vpop.f32.mrb[0].mxu0
    %v1281 = vpop.f32.mrb[0].mxu0
    %v1282 = vadd.f32 %v930, %v1281
    %v1283 = vpop.f32.mrb[0].mxu0
    %1284 = vmatprep.mubr.bf16.mxu0 0
    %1285 = vmatmul.mubr.bf16.gmra.mrb[0].mxu0 %v905
    %v1286 = vpop.f32.mrb[0].mxu0
    %v1287 = vadd.f32 %v930, %v1286
    %v1288 = vpop.f32.mrb[0].mxu0
    %v1289 = vpop.f32.mrb[0].mxu0
    %v1290 = vadd.f32 %v930, %v1289
    %v1291 = vpop.f32.mrb[0].mxu0
    %1292 = vmatprep.mubr.bf16.mxu0 0
    %1293 = vmatmul.mubr.bf16.gmra.mrb[0].mxu0 %v906
    %v1294 = vpop.f32.mrb[0].mxu0
    %v1295 = vadd.f32 %v930, %v1294
    %v1296 = vpop.f32.mrb[0].mxu0
    %v1297 = vpop.f32.mrb[0].mxu0
    %v1298 = vadd.f32 %v930, %v1297
    %v1299 = vpop.f32.mrb[0].mxu0
    %1300 = vmatprep.mubr.bf16.mxu0 0
    %1301 = vmatmul.mubr.bf16.gmra.mrb[0].mxu0 %v907
    %v1302 = vpop.f32.mrb[0].mxu0
    %v1303 = vadd.f32 %v930, %v1302
    %v1304 = vpop.f32.mrb[0].mxu0
    %v1305 = vpop.f32.mrb[0].mxu0
    %v1306 = vadd.f32 %v930, %v1305
    %v1307 = vpop.f32.mrb[0].mxu0
    %1308 = vmatprep.mubr.bf16.mxu0 0
    %1309 = vmatmul.mubr.bf16.gmra.mrb[0].mxu0 %v908
    %v1310 = vpop.f32.mrb[0].mxu0
    %v1311 = vadd.f32 %v930, %v1310
    %v1312 = vpop.f32.mrb[0].mxu0
    %v1313 = vpop.f32.mrb[0].mxu0
    %v1314 = vadd.f32 %v930, %v1313
    %v1315 = vpop.f32.mrb[0].mxu0
    %1316 = vdwg.mxu0
    %v1317 = vmax.f32 %v1015, 0.0
    %v1318 = vmax.f32 %v1018, 0.0
    %v1319 = vmax.f32 %v1023, 0.0
    %v1320 = vmax.f32 %v1026, 0.0
    %v1321 = vmax.f32 %v1031, 0.0
    %v1322 = vmax.f32 %v1034, 0.0
    %v1323 = vmax.f32 %v1039, 0.0
    %v1324 = vmax.f32 %v1042, 0.0
    %v1325 = vmax.f32 %v1047, 0.0
    %v1326 = vmax.f32 %v1050, 0.0
    %v1327 = vmax.f32 %v1055, 0.0
    %v1328 = vmax.f32 %v1058, 0.0
    %v1329 = vmax.f32 %v1063, 0.0
    %v1330 = vmax.f32 %v1066, 0.0
    %v1331 = vmax.f32 %v1071, 0.0
    %v1332 = vmax.f32 %v1074, 0.0
    %v1333 = vmax.f32 %v1079, 0.0
    %v1334 = vmax.f32 %v1082, 0.0
    %v1335 = vmax.f32 %v1087, 0.0
    %v1336 = vmax.f32 %v1090, 0.0
    %v1337 = vmax.f32 %v1095, 0.0
    %v1338 = vmax.f32 %v1098, 0.0
    %v1339 = vmax.f32 %v1103, 0.0
    %v1340 = vmax.f32 %v1106, 0.0
    %v1341 = vmax.f32 %v1111, 0.0
    %v1342 = vmax.f32 %v1114, 0.0
    %v1343 = vmax.f32 %v1119, 0.0
    %v1344 = vmax.f32 %v1122, 0.0
    %v1345 = vmax.f32 %v1127, 0.0
    %v1346 = vmax.f32 %v1130, 0.0
    %v1347 = vmax.f32 %v1135, 0.0
    %v1348 = vmax.f32 %v1138, 0.0
    %v1349 = vmax.f32 %v1143, 0.0
    %v1350 = vmax.f32 %v1146, 0.0
    %v1351 = vmax.f32 %v1151, 0.0
    %v1352 = vmax.f32 %v1154, 0.0
    %v1353 = vmax.f32 %v1159, 0.0
    %v1354 = vmax.f32 %v1162, 0.0
    %v1355 = vmax.f32 %v1167, 0.0
    %v1356 = vmax.f32 %v1170, 0.0
    %v1357 = vmax.f32 %v1175, 0.0
    %v1358 = vmax.f32 %v1178, 0.0
    %v1359 = vmax.f32 %v1183, 0.0
    %v1360 = vmax.f32 %v1186, 0.0
    %v1361 = vmax.f32 %v1191, 0.0
    %v1362 = vmax.f32 %v1194, 0.0
    %v1363 = vmax.f32 %v1199, 0.0
    %v1364 = vmax.f32 %v1202, 0.0
    %v1365 = vmax.f32 %v1207, 0.0
    %v1366 = vmax.f32 %v1210, 0.0
    %v1367 = vmax.f32 %v1215, 0.0
    %v1368 = vmax.f32 %v1218, 0.0
    %v1369 = vmax.f32 %v1223, 0.0
    %v1370 = vmax.f32 %v1226, 0.0
    %v1371 = vmax.f32 %v1231, 0.0
    %v1372 = vmax.f32 %v1234, 0.0
    %v1373 = vmax.f32 %v1239, 0.0
    %v1374 = vmax.f32 %v1242, 0.0
    %v1375 = vmax.f32 %v1247, 0.0
    %v1376 = vmax.f32 %v1250, 0.0
    %v1377 = vmax.f32 %v1255, 0.0
    %v1378 = vmax.f32 %v1258, 0.0
    %v1379 = vmax.f32 %v1263, 0.0
    %v1380 = vmax.f32 %v1266, 0.0
    %v1381 = vmax.f32 %v1271, 0.0
    %v1382 = vmax.f32 %v1274, 0.0
    %v1383 = vmax.f32 %v1279, 0.0
    %v1384 = vmax.f32 %v1282, 0.0
    %v1385 = vmax.f32 %v1287, 0.0
    %v1386 = vmax.f32 %v1290, 0.0
    %v1387 = vmax.f32 %v1295, 0.0
    %v1388 = vmax.f32 %v1298, 0.0
    %v1389 = vmax.f32 %v1303, 0.0
    %v1390 = vmax.f32 %v1306, 0.0
    %v1391 = vmax.f32 %v1311, 0.0
    %v1392 = vmax.f32 %v1314, 0.0
    %v1393 = vpack.c.bf16 %v1318, %v1317
    %v1394 = vpack.c.bf16 %v1320, %v1319
    %v1395 = vpack.c.bf16 %v1322, %v1321
    %v1396 = vpack.c.bf16 %v1324, %v1323
    %v1397 = vpack.c.bf16 %v1326, %v1325
    %v1398 = vpack.c.bf16 %v1328, %v1327
    %v1399 = vpack.c.bf16 %v1330, %v1329
    %v1400 = vpack.c.bf16 %v1332, %v1331
    %v1401 = vpack.c.bf16 %v1334, %v1333
    %v1402 = vpack.c.bf16 %v1336, %v1335
    %v1403 = vpack.c.bf16 %v1338, %v1337
    %v1404 = vpack.c.bf16 %v1340, %v1339
    %v1405 = vpack.c.bf16 %v1342, %v1341
    %v1406 = vpack.c.bf16 %v1344, %v1343
    %v1407 = vpack.c.bf16 %v1346, %v1345
    %v1408 = vpack.c.bf16 %v1348, %v1347
    %v1409 = vpack.c.bf16 %v1350, %v1349
    %v1410 = vpack.c.bf16 %v1352, %v1351
    %v1411 = vpack.c.bf16 %v1354, %v1353
    %v1412 = vpack.c.bf16 %v1356, %v1355
    %v1413 = vpack.c.bf16 %v1358, %v1357
    %v1414 = vpack.c.bf16 %v1360, %v1359
    %v1415 = vpack.c.bf16 %v1362, %v1361
    %v1416 = vpack.c.bf16 %v1364, %v1363
    %v1417 = vpack.c.bf16 %v1366, %v1365
    %v1418 = vpack.c.bf16 %v1368, %v1367
    %v1419 = vpack.c.bf16 %v1370, %v1369
    %v1420 = vpack.c.bf16 %v1372, %v1371
    %v1421 = vpack.c.bf16 %v1374, %v1373
    %v1422 = vpack.c.bf16 %v1376, %v1375
    %v1423 = vpack.c.bf16 %v1378, %v1377
    %v1424 = vpack.c.bf16 %v1380, %v1379
    %v1425 = vpack.c.bf16 %v1382, %v1381
    %v1426 = vpack.c.bf16 %v1384, %v1383
    %v1427 = vpack.c.bf16 %v1386, %v1385
    %v1428 = vpack.c.bf16 %v1388, %v1387
    %v1429 = vpack.c.bf16 %v1390, %v1389
    %v1430 = vpack.c.bf16 %v1392, %v1391
    %v1431 = vld [vmem:[#allocation8] sm:$0xf]
    %v1432 = vld [vmem:[#allocation8 + $0x4] sm:$0xf]
    %v1433 = vld [vmem:[#allocation8 + $0x8] sm:$0xf]
    %v1434 = vld [vmem:[#allocation8 + $0xc] sm:$0xf]
    %v1435 = vld [vmem:[#allocation8 + $0x10] sm:$0xf]
    %v1436 = vld [vmem:[#allocation8 + $0x14] sm:$0xf]
    %v1437 = vld [vmem:[#allocation8 + $0x18] sm:$0xf]
    %v1438 = vld [vmem:[#allocation8 + $0x1c] sm:$0xf]
    %v1439 = vld [vmem:[#allocation8 + $0x20] sm:$0xf]
    %v1440 = vld [vmem:[#allocation8 + $0x24] sm:$0xf]
    %v1441 = vld [vmem:[#allocation8 + $0x28] sm:$0xf]
    %v1442 = vld [vmem:[#allocation8 + $0x2c] sm:$0xf]
    %v1443 = vld [vmem:[#allocation8 + $0x30] sm:$0xf]
    %v1444 = vld [vmem:[#allocation8 + $0x34] sm:$0xf]
    %v1445 = vld [vmem:[#allocation8 + $0x38] sm:$0xf]
    %v1446 = vld [vmem:[#allocation8 + $0x3c] sm:$0xf]
    %v1447 = vld [vmem:[%s6] sm:$0x1]
    %v1449 = vlaneseq
    %v1450 = vshrl.u32 %v1449, 7
    %v1451 = vsub.s32 0, %v1450
    %v1452 = vrot.slane %v1447, %v1451
    %v1470 = vunpack.c.l.b16 %v1431
    %v1471 = vunpack.c.l.b16 %v1432
    %v1472 = vunpack.c.l.b16 %v1433
    %v1473 = vunpack.c.l.b16 %v1434
    %v1474 = vunpack.c.l.b16 %v1435
    %v1475 = vunpack.c.l.b16 %v1436
    %v1476 = vunpack.c.l.b16 %v1437
    %v1477 = vunpack.c.l.b16 %v1438
    %v1478 = vunpack.c.l.b16 %v1439
    %v1479 = vunpack.c.l.b16 %v1440
    %v1480 = vunpack.c.l.b16 %v1441
    %v1481 = vunpack.c.l.b16 %v1442
    %v1482 = vunpack.c.l.b16 %v1443
    %v1483 = vunpack.c.l.b16 %v1444
    %v1484 = vunpack.c.l.b16 %v1445
    %v1485 = vunpack.c.l.b16 %v1446
    %v1486 = vpack.c.b16 %v1471, %v1470
    %v1487 = vpack.c.b16 %v1473, %v1472
    %v1488 = vpack.c.b16 %v1475, %v1474
    %v1489 = vpack.c.b16 %v1477, %v1476
    %v1490 = vpack.c.b16 %v1479, %v1478
    %v1491 = vpack.c.b16 %v1481, %v1480
    %v1492 = vpack.c.b16 %v1483, %v1482
    %v1493 = vpack.c.b16 %v1485, %v1484
    %1502 = vmatprep.subr.bf16.mxu0 0
    %1503 = vmatpush1.bf16.msra.mxu0 %v1486
    %1504 = vmatprep.subr.bf16.mxu0 0
    %1505 = vmatpush1.bf16.msra.mxu0 %v1487
    %1506 = vmatprep.subr.bf16.mxu0 0
    %1507 = vmatpush1.bf16.msra.mxu0 %v1488
    %1508 = vmatprep.subr.bf16.mxu0 0
    %1509 = vmatpush1.bf16.msra.mxu0 %v1489
    %1510 = vmatprep.subr.bf16.mxu0 0
    %1511 = vmatpush1.bf16.msra.mxu0 %v1490
    %1512 = vmatprep.subr.bf16.mxu0 0
    %1513 = vmatpush1.bf16.msra.mxu0 %v1491
    %1514 = vmatprep.subr.bf16.mxu0 0
    %1515 = vmatpush1.bf16.msra.mxu0 %v1492
    %1516 = vmatprep.subr.bf16.mxu0 0
    %1517 = vmatpush1.bf16.msra.mxu0 %v1493
    %1518 = vmatprep.subr.bf16.mxu0 0
    %1519 = vmatpush1.bf16.msra.mxu0 0
    %1520 = vmatprep.subr.bf16.mxu0 0
    %1521 = vmatpush1.bf16.msra.mxu0 0
    %1522 = vmatprep.subr.bf16.mxu0 0
    %1523 = vmatpush1.bf16.msra.mxu0 0
    %1524 = vmatprep.subr.bf16.mxu0 0
    %1525 = vmatpush1.bf16.msra.mxu0 0
    %1526 = vmatprep.subr.bf16.mxu0 0
    %1527 = vmatpush1.bf16.msra.mxu0 0
    %1528 = vmatprep.subr.bf16.mxu0 0
    %1529 = vmatpush1.bf16.msra.mxu0 0
    %1530 = vmatprep.subr.bf16.mxu0 0
    %1531 = vmatpush1.bf16.msra.mxu0 0
    %1532 = vmatprep.subr.bf16.mxu0 0
    %1533 = vmatpush1.bf16.msra.mxu0 0
    %1534 = vmatprep.mubr.bf16.mxu0 0
    %1535 = vmatmul.mubr.bf16.gmra.mrb[0].mxu0 %v1393
    %v1536 = vpop.f32.mrb[0].mxu0
    %v1537 = vadd.f32 %v1452, %v1536
    %v1538 = vpop.f32.mrb[0].mxu0
    %v1539 = vpop.f32.mrb[0].mxu0
    %v1540 = vadd.f32 %v1452, %v1539
    %v1541 = vpop.f32.mrb[0].mxu0
    %1542 = vmatprep.mubr.bf16.mxu0 0
    %1543 = vmatmul.mubr.bf16.gmra.mrb[0].mxu0 %v1394
    %v1544 = vpop.f32.mrb[0].mxu0
    %v1545 = vadd.f32 %v1452, %v1544
    %v1546 = vpop.f32.mrb[0].mxu0
    %v1547 = vpop.f32.mrb[0].mxu0
    %v1548 = vadd.f32 %v1452, %v1547
    %v1549 = vpop.f32.mrb[0].mxu0
    %1550 = vmatprep.mubr.bf16.mxu0 0
    %1551 = vmatmul.mubr.bf16.gmra.mrb[0].mxu0 %v1395
    %v1552 = vpop.f32.mrb[0].mxu0
    %v1553 = vadd.f32 %v1452, %v1552
    %v1554 = vpop.f32.mrb[0].mxu0
    %v1555 = vpop.f32.mrb[0].mxu0
    %v1556 = vadd.f32 %v1452, %v1555
    %v1557 = vpop.f32.mrb[0].mxu0
    %1558 = vmatprep.mubr.bf16.mxu0 0
    %1559 = vmatmul.mubr.bf16.gmra.mrb[0].mxu0 %v1396
    %v1560 = vpop.f32.mrb[0].mxu0
    %v1561 = vadd.f32 %v1452, %v1560
    %v1562 = vpop.f32.mrb[0].mxu0
    %v1563 = vpop.f32.mrb[0].mxu0
    %v1564 = vadd.f32 %v1452, %v1563
    %v1565 = vpop.f32.mrb[0].mxu0
    %1566 = vmatprep.mubr.bf16.mxu0 0
    %1567 = vmatmul.mubr.bf16.gmra.mrb[0].mxu0 %v1397
    %v1568 = vpop.f32.mrb[0].mxu0
    %v1569 = vadd.f32 %v1452, %v1568
    %v1570 = vpop.f32.mrb[0].mxu0
    %v1571 = vpop.f32.mrb[0].mxu0
    %v1572 = vadd.f32 %v1452, %v1571
    %v1573 = vpop.f32.mrb[0].mxu0
    %1574 = vmatprep.mubr.bf16.mxu0 0
    %1575 = vmatmul.mubr.bf16.gmra.mrb[0].mxu0 %v1398
    %v1576 = vpop.f32.mrb[0].mxu0
    %v1577 = vadd.f32 %v1452, %v1576
    %v1578 = vpop.f32.mrb[0].mxu0
    %v1579 = vpop.f32.mrb[0].mxu0
    %v1580 = vadd.f32 %v1452, %v1579
    %v1581 = vpop.f32.mrb[0].mxu0
    %1582 = vmatprep.mubr.bf16.mxu0 0
    %1583 = vmatmul.mubr.bf16.gmra.mrb[0].mxu0 %v1399
    %v1584 = vpop.f32.mrb[0].mxu0
    %v1585 = vadd.f32 %v1452, %v1584
    %v1586 = vpop.f32.mrb[0].mxu0
    %v1587 = vpop.f32.mrb[0].mxu0
    %v1588 = vadd.f32 %v1452, %v1587
    %v1589 = vpop.f32.mrb[0].mxu0
    %1590 = vmatprep.mubr.bf16.mxu0 0
    %1591 = vmatmul.mubr.bf16.gmra.mrb[0].mxu0 %v1400
    %v1592 = vpop.f32.mrb[0].mxu0
    %v1593 = vadd.f32 %v1452, %v1592
    %v1594 = vpop.f32.mrb[0].mxu0
    %v1595 = vpop.f32.mrb[0].mxu0
    %v1596 = vadd.f32 %v1452, %v1595
    %v1597 = vpop.f32.mrb[0].mxu0
    %1598 = vmatprep.mubr.bf16.mxu0 0
    %1599 = vmatmul.mubr.bf16.gmra.mrb[0].mxu0 %v1401
    %v1600 = vpop.f32.mrb[0].mxu0
    %v1601 = vadd.f32 %v1452, %v1600
    %v1602 = vpop.f32.mrb[0].mxu0
    %v1603 = vpop.f32.mrb[0].mxu0
    %v1604 = vadd.f32 %v1452, %v1603
    %v1605 = vpop.f32.mrb[0].mxu0
    %1606 = vmatprep.mubr.bf16.mxu0 0
    %1607 = vmatmul.mubr.bf16.gmra.mrb[0].mxu0 %v1402
    %v1608 = vpop.f32.mrb[0].mxu0
    %v1609 = vadd.f32 %v1452, %v1608
    %v1610 = vpop.f32.mrb[0].mxu0
    %v1611 = vpop.f32.mrb[0].mxu0
    %v1612 = vadd.f32 %v1452, %v1611
    %v1613 = vpop.f32.mrb[0].mxu0
    %1614 = vmatprep.mubr.bf16.mxu0 0
    %1615 = vmatmul.mubr.bf16.gmra.mrb[0].mxu0 %v1403
    %v1616 = vpop.f32.mrb[0].mxu0
    %v1617 = vadd.f32 %v1452, %v1616
    %v1618 = vpop.f32.mrb[0].mxu0
    %v1619 = vpop.f32.mrb[0].mxu0
    %v1620 = vadd.f32 %v1452, %v1619
    %v1621 = vpop.f32.mrb[0].mxu0
    %1622 = vmatprep.mubr.bf16.mxu0 0
    %1623 = vmatmul.mubr.bf16.gmra.mrb[0].mxu0 %v1404
    %v1624 = vpop.f32.mrb[0].mxu0
    %v1625 = vadd.f32 %v1452, %v1624
    %v1626 = vpop.f32.mrb[0].mxu0
    %v1627 = vpop.f32.mrb[0].mxu0
    %v1628 = vadd.f32 %v1452, %v1627
    %v1629 = vpop.f32.mrb[0].mxu0
    %1630 = vmatprep.mubr.bf16.mxu0 0
    %1631 = vmatmul.mubr.bf16.gmra.mrb[0].mxu0 %v1405
    %v1632 = vpop.f32.mrb[0].mxu0
    %v1633 = vadd.f32 %v1452, %v1632
    %v1634 = vpop.f32.mrb[0].mxu0
    %v1635 = vpop.f32.mrb[0].mxu0
    %v1636 = vadd.f32 %v1452, %v1635
    %v1637 = vpop.f32.mrb[0].mxu0
    %1638 = vmatprep.mubr.bf16.mxu0 0
    %1639 = vmatmul.mubr.bf16.gmra.mrb[0].mxu0 %v1406
    %v1640 = vpop.f32.mrb[0].mxu0
    %v1641 = vadd.f32 %v1452, %v1640
    %v1642 = vpop.f32.mrb[0].mxu0
    %v1643 = vpop.f32.mrb[0].mxu0
    %v1644 = vadd.f32 %v1452, %v1643
    %v1645 = vpop.f32.mrb[0].mxu0
    %1646 = vmatprep.mubr.bf16.mxu0 0
    %1647 = vmatmul.mubr.bf16.gmra.mrb[0].mxu0 %v1407
    %v1648 = vpop.f32.mrb[0].mxu0
    %v1649 = vadd.f32 %v1452, %v1648
    %v1650 = vpop.f32.mrb[0].mxu0
    %v1651 = vpop.f32.mrb[0].mxu0
    %v1652 = vadd.f32 %v1452, %v1651
    %v1653 = vpop.f32.mrb[0].mxu0
    %1654 = vmatprep.mubr.bf16.mxu0 0
    %1655 = vmatmul.mubr.bf16.gmra.mrb[0].mxu0 %v1408
    %v1656 = vpop.f32.mrb[0].mxu0
    %v1657 = vadd.f32 %v1452, %v1656
    %v1658 = vpop.f32.mrb[0].mxu0
    %v1659 = vpop.f32.mrb[0].mxu0
    %v1660 = vadd.f32 %v1452, %v1659
    %v1661 = vpop.f32.mrb[0].mxu0
    %1662 = vmatprep.mubr.bf16.mxu0 0
    %1663 = vmatmul.mubr.bf16.gmra.mrb[0].mxu0 %v1409
    %v1664 = vpop.f32.mrb[0].mxu0
    %v1665 = vadd.f32 %v1452, %v1664
    %v1666 = vpop.f32.mrb[0].mxu0
    %v1667 = vpop.f32.mrb[0].mxu0
    %v1668 = vadd.f32 %v1452, %v1667
    %v1669 = vpop.f32.mrb[0].mxu0
    %1670 = vmatprep.mubr.bf16.mxu0 0
    %1671 = vmatmul.mubr.bf16.gmra.mrb[0].mxu0 %v1410
    %v1672 = vpop.f32.mrb[0].mxu0
    %v1673 = vadd.f32 %v1452, %v1672
    %v1674 = vpop.f32.mrb[0].mxu0
    %v1675 = vpop.f32.mrb[0].mxu0
    %v1676 = vadd.f32 %v1452, %v1675
    %v1677 = vpop.f32.mrb[0].mxu0
    %1678 = vmatprep.mubr.bf16.mxu0 0
    %1679 = vmatmul.mubr.bf16.gmra.mrb[0].mxu0 %v1411
    %v1680 = vpop.f32.mrb[0].mxu0
    %v1681 = vadd.f32 %v1452, %v1680
    %v1682 = vpop.f32.mrb[0].mxu0
    %v1683 = vpop.f32.mrb[0].mxu0
    %v1684 = vadd.f32 %v1452, %v1683
    %v1685 = vpop.f32.mrb[0].mxu0
    %1686 = vmatprep.mubr.bf16.mxu0 0
    %1687 = vmatmul.mubr.bf16.gmra.mrb[0].mxu0 %v1412
    %v1688 = vpop.f32.mrb[0].mxu0
    %v1689 = vadd.f32 %v1452, %v1688
    %v1690 = vpop.f32.mrb[0].mxu0
    %v1691 = vpop.f32.mrb[0].mxu0
    %v1692 = vadd.f32 %v1452, %v1691
    %v1693 = vpop.f32.mrb[0].mxu0
    %1694 = vmatprep.mubr.bf16.mxu0 0
    %1695 = vmatmul.mubr.bf16.gmra.mrb[0].mxu0 %v1413
    %v1696 = vpop.f32.mrb[0].mxu0
    %v1697 = vadd.f32 %v1452, %v1696
    %v1698 = vpop.f32.mrb[0].mxu0
    %v1699 = vpop.f32.mrb[0].mxu0
    %v1700 = vadd.f32 %v1452, %v1699
    %v1701 = vpop.f32.mrb[0].mxu0
    %1702 = vmatprep.mubr.bf16.mxu0 0
    %1703 = vmatmul.mubr.bf16.gmra.mrb[0].mxu0 %v1414
    %v1704 = vpop.f32.mrb[0].mxu0
    %v1705 = vadd.f32 %v1452, %v1704
    %v1706 = vpop.f32.mrb[0].mxu0
    %v1707 = vpop.f32.mrb[0].mxu0
    %v1708 = vadd.f32 %v1452, %v1707
    %v1709 = vpop.f32.mrb[0].mxu0
    %1710 = vmatprep.mubr.bf16.mxu0 0
    %1711 = vmatmul.mubr.bf16.gmra.mrb[0].mxu0 %v1415
    %v1712 = vpop.f32.mrb[0].mxu0
    %v1713 = vadd.f32 %v1452, %v1712
    %v1714 = vpop.f32.mrb[0].mxu0
    %v1715 = vpop.f32.mrb[0].mxu0
    %v1716 = vadd.f32 %v1452, %v1715
    %v1717 = vpop.f32.mrb[0].mxu0
    %1718 = vmatprep.mubr.bf16.mxu0 0
    %1719 = vmatmul.mubr.bf16.gmra.mrb[0].mxu0 %v1416
    %v1720 = vpop.f32.mrb[0].mxu0
    %v1721 = vadd.f32 %v1452, %v1720
    %v1722 = vpop.f32.mrb[0].mxu0
    %v1723 = vpop.f32.mrb[0].mxu0
    %v1724 = vadd.f32 %v1452, %v1723
    %v1725 = vpop.f32.mrb[0].mxu0
    %1726 = vmatprep.mubr.bf16.mxu0 0
    %1727 = vmatmul.mubr.bf16.gmra.mrb[0].mxu0 %v1417
    %v1728 = vpop.f32.mrb[0].mxu0
    %v1729 = vadd.f32 %v1452, %v1728
    %v1730 = vpop.f32.mrb[0].mxu0
    %v1731 = vpop.f32.mrb[0].mxu0
    %v1732 = vadd.f32 %v1452, %v1731
    %v1733 = vpop.f32.mrb[0].mxu0
    %1734 = vmatprep.mubr.bf16.mxu0 0
    %1735 = vmatmul.mubr.bf16.gmra.mrb[0].mxu0 %v1418
    %v1736 = vpop.f32.mrb[0].mxu0
    %v1737 = vadd.f32 %v1452, %v1736
    %v1738 = vpop.f32.mrb[0].mxu0
    %v1739 = vpop.f32.mrb[0].mxu0
    %v1740 = vadd.f32 %v1452, %v1739
    %v1741 = vpop.f32.mrb[0].mxu0
    %1742 = vmatprep.mubr.bf16.mxu0 0
    %1743 = vmatmul.mubr.bf16.gmra.mrb[0].mxu0 %v1419
    %v1744 = vpop.f32.mrb[0].mxu0
    %v1745 = vadd.f32 %v1452, %v1744
    %v1746 = vpop.f32.mrb[0].mxu0
    %v1747 = vpop.f32.mrb[0].mxu0
    %v1748 = vadd.f32 %v1452, %v1747
    %v1749 = vpop.f32.mrb[0].mxu0
    %1750 = vmatprep.mubr.bf16.mxu0 0
    %1751 = vmatmul.mubr.bf16.gmra.mrb[0].mxu0 %v1420
    %v1752 = vpop.f32.mrb[0].mxu0
    %v1753 = vadd.f32 %v1452, %v1752
    %v1754 = vpop.f32.mrb[0].mxu0
    %v1755 = vpop.f32.mrb[0].mxu0
    %v1756 = vadd.f32 %v1452, %v1755
    %v1757 = vpop.f32.mrb[0].mxu0
    %1758 = vmatprep.mubr.bf16.mxu0 0
    %1759 = vmatmul.mubr.bf16.gmra.mrb[0].mxu0 %v1421
    %v1760 = vpop.f32.mrb[0].mxu0
    %v1761 = vadd.f32 %v1452, %v1760
    %v1762 = vpop.f32.mrb[0].mxu0
    %v1763 = vpop.f32.mrb[0].mxu0
    %v1764 = vadd.f32 %v1452, %v1763
    %v1765 = vpop.f32.mrb[0].mxu0
    %1766 = vmatprep.mubr.bf16.mxu0 0
    %1767 = vmatmul.mubr.bf16.gmra.mrb[0].mxu0 %v1422
    %v1768 = vpop.f32.mrb[0].mxu0
    %v1769 = vadd.f32 %v1452, %v1768
    %v1770 = vpop.f32.mrb[0].mxu0
    %v1771 = vpop.f32.mrb[0].mxu0
    %v1772 = vadd.f32 %v1452, %v1771
    %v1773 = vpop.f32.mrb[0].mxu0
    %1774 = vmatprep.mubr.bf16.mxu0 0
    %1775 = vmatmul.mubr.bf16.gmra.mrb[0].mxu0 %v1423
    %v1776 = vpop.f32.mrb[0].mxu0
    %v1777 = vadd.f32 %v1452, %v1776
    %v1778 = vpop.f32.mrb[0].mxu0
    %v1779 = vpop.f32.mrb[0].mxu0
    %v1780 = vadd.f32 %v1452, %v1779
    %v1781 = vpop.f32.mrb[0].mxu0
    %1782 = vmatprep.mubr.bf16.mxu0 0
    %1783 = vmatmul.mubr.bf16.gmra.mrb[0].mxu0 %v1424
    %v1784 = vpop.f32.mrb[0].mxu0
    %v1785 = vadd.f32 %v1452, %v1784
    %v1786 = vpop.f32.mrb[0].mxu0
    %v1787 = vpop.f32.mrb[0].mxu0
    %v1788 = vadd.f32 %v1452, %v1787
    %v1789 = vpop.f32.mrb[0].mxu0
    %1790 = vmatprep.mubr.bf16.mxu0 0
    %1791 = vmatmul.mubr.bf16.gmra.mrb[0].mxu0 %v1425
    %v1792 = vpop.f32.mrb[0].mxu0
    %v1793 = vadd.f32 %v1452, %v1792
    %v1794 = vpop.f32.mrb[0].mxu0
    %v1795 = vpop.f32.mrb[0].mxu0
    %v1796 = vadd.f32 %v1452, %v1795
    %v1797 = vpop.f32.mrb[0].mxu0
    %1798 = vmatprep.mubr.bf16.mxu0 0
    %1799 = vmatmul.mubr.bf16.gmra.mrb[0].mxu0 %v1426
    %v1800 = vpop.f32.mrb[0].mxu0
    %v1801 = vadd.f32 %v1452, %v1800
    %v1802 = vpop.f32.mrb[0].mxu0
    %v1803 = vpop.f32.mrb[0].mxu0
    %v1804 = vadd.f32 %v1452, %v1803
    %v1805 = vpop.f32.mrb[0].mxu0
    %1806 = vmatprep.mubr.bf16.mxu0 0
    %1807 = vmatmul.mubr.bf16.gmra.mrb[0].mxu0 %v1427
    %v1808 = vpop.f32.mrb[0].mxu0
    %v1809 = vadd.f32 %v1452, %v1808
    %v1810 = vpop.f32.mrb[0].mxu0
    %v1811 = vpop.f32.mrb[0].mxu0
    %v1812 = vadd.f32 %v1452, %v1811
    %v1813 = vpop.f32.mrb[0].mxu0
    %1814 = vmatprep.mubr.bf16.mxu0 0
    %1815 = vmatmul.mubr.bf16.gmra.mrb[0].mxu0 %v1428
    %v1816 = vpop.f32.mrb[0].mxu0
    %v1817 = vadd.f32 %v1452, %v1816
    %v1818 = vpop.f32.mrb[0].mxu0
    %v1819 = vpop.f32.mrb[0].mxu0
    %v1820 = vadd.f32 %v1452, %v1819
    %v1821 = vpop.f32.mrb[0].mxu0
    %1822 = vmatprep.mubr.bf16.mxu0 0
    %1823 = vmatmul.mubr.bf16.gmra.mrb[0].mxu0 %v1429
    %v1824 = vpop.f32.mrb[0].mxu0
    %v1825 = vadd.f32 %v1452, %v1824
    %v1826 = vpop.f32.mrb[0].mxu0
    %v1827 = vpop.f32.mrb[0].mxu0
    %v1828 = vadd.f32 %v1452, %v1827
    %v1829 = vpop.f32.mrb[0].mxu0
    %1830 = vmatprep.mubr.bf16.mxu0 0
    %1831 = vmatmul.mubr.bf16.gmra.mrb[0].mxu0 %v1430
    %v1832 = vpop.f32.mrb[0].mxu0
    %v1833 = vadd.f32 %v1452, %v1832
    %v1834 = vpop.f32.mrb[0].mxu0
    %v1835 = vpop.f32.mrb[0].mxu0
    %v1836 = vadd.f32 %v1452, %v1835
    %v1837 = vpop.f32.mrb[0].mxu0
    %1838 = vdwg.mxu0
    %1839 = vmax.xlane.f32.xlu0 %v1537
    %v1840 = vpop.xlane.xlu0 %1839
    %1841 = vmax.xlane.f32.xlu0 %v1540
    %v1842 = vpop.xlane.xlu0 %1841
    %1843 = vmax.xlane.f32.xlu0 %v1545
    %v1844 = vpop.xlane.xlu0 %1843
    %1845 = vmax.xlane.f32.xlu0 %v1548
    %v1846 = vpop.xlane.xlu0 %1845
    %1847 = vmax.xlane.f32.xlu0 %v1553
    %v1848 = vpop.xlane.xlu0 %1847
    %1849 = vmax.xlane.f32.xlu0 %v1556
    %v1850 = vpop.xlane.xlu0 %1849
    %1851 = vmax.xlane.f32.xlu0 %v1561
    %v1852 = vpop.xlane.xlu0 %1851
    %1853 = vmax.xlane.f32.xlu0 %v1564
    %v1854 = vpop.xlane.xlu0 %1853
    %1855 = vmax.xlane.f32.xlu0 %v1569
    %v1856 = vpop.xlane.xlu0 %1855
    %1857 = vmax.xlane.f32.xlu0 %v1572
    %v1858 = vpop.xlane.xlu0 %1857
    %1859 = vmax.xlane.f32.xlu0 %v1577
    %v1860 = vpop.xlane.xlu0 %1859
    %1861 = vmax.xlane.f32.xlu0 %v1580
    %v1862 = vpop.xlane.xlu0 %1861
    %1863 = vmax.xlane.f32.xlu0 %v1585
    %v1864 = vpop.xlane.xlu0 %1863
    %1865 = vmax.xlane.f32.xlu0 %v1588
    %v1866 = vpop.xlane.xlu0 %1865
    %1867 = vmax.xlane.f32.xlu0 %v1593
    %v1868 = vpop.xlane.xlu0 %1867
    %1869 = vmax.xlane.f32.xlu0 %v1596
    %v1870 = vpop.xlane.xlu0 %1869
    %1871 = vmax.xlane.f32.xlu0 %v1601
    %v1872 = vpop.xlane.xlu0 %1871
    %1873 = vmax.xlane.f32.xlu0 %v1604
    %v1874 = vpop.xlane.xlu0 %1873
    %1875 = vmax.xlane.f32.xlu0 %v1609
    %v1876 = vpop.xlane.xlu0 %1875
    %1877 = vmax.xlane.f32.xlu0 %v1612
    %v1878 = vpop.xlane.xlu0 %1877
    %1879 = vmax.xlane.f32.xlu0 %v1617
    %v1880 = vpop.xlane.xlu0 %1879
    %1881 = vmax.xlane.f32.xlu0 %v1620
    %v1882 = vpop.xlane.xlu0 %1881
    %1883 = vmax.xlane.f32.xlu0 %v1625
    %v1884 = vpop.xlane.xlu0 %1883
    %1885 = vmax.xlane.f32.xlu0 %v1628
    %v1886 = vpop.xlane.xlu0 %1885
    %1887 = vmax.xlane.f32.xlu0 %v1633
    %v1888 = vpop.xlane.xlu0 %1887
    %1889 = vmax.xlane.f32.xlu0 %v1636
    %v1890 = vpop.xlane.xlu0 %1889
    %1891 = vmax.xlane.f32.xlu0 %v1641
    %v1892 = vpop.xlane.xlu0 %1891
    %1893 = vmax.xlane.f32.xlu0 %v1644
    %v1894 = vpop.xlane.xlu0 %1893
    %1895 = vmax.xlane.f32.xlu0 %v1649
    %v1896 = vpop.xlane.xlu0 %1895
    %1897 = vmax.xlane.f32.xlu0 %v1652
    %v1898 = vpop.xlane.xlu0 %1897
    %1899 = vmax.xlane.f32.xlu0 %v1657
    %v1900 = vpop.xlane.xlu0 %1899
    %1901 = vmax.xlane.f32.xlu0 %v1660
    %v1902 = vpop.xlane.xlu0 %1901
    %1903 = vmax.xlane.f32.xlu0 %v1665
    %v1904 = vpop.xlane.xlu0 %1903
    %1905 = vmax.xlane.f32.xlu0 %v1668
    %v1906 = vpop.xlane.xlu0 %1905
    %1907 = vmax.xlane.f32.xlu0 %v1673
    %v1908 = vpop.xlane.xlu0 %1907
    %1909 = vmax.xlane.f32.xlu0 %v1676
    %v1910 = vpop.xlane.xlu0 %1909
    %1911 = vmax.xlane.f32.xlu0 %v1681
    %v1912 = vpop.xlane.xlu0 %1911
    %1913 = vmax.xlane.f32.xlu0 %v1684
    %v1914 = vpop.xlane.xlu0 %1913
    %1915 = vmax.xlane.f32.xlu0 %v1689
    %v1916 = vpop.xlane.xlu0 %1915
    %1917 = vmax.xlane.f32.xlu0 %v1692
    %v1918 = vpop.xlane.xlu0 %1917
    %1919 = vmax.xlane.f32.xlu0 %v1697
    %v1920 = vpop.xlane.xlu0 %1919
    %1921 = vmax.xlane.f32.xlu0 %v1700
    %v1922 = vpop.xlane.xlu0 %1921
    %1923 = vmax.xlane.f32.xlu0 %v1705
    %v1924 = vpop.xlane.xlu0 %1923
    %1925 = vmax.xlane.f32.xlu0 %v1708
    %v1926 = vpop.xlane.xlu0 %1925
    %1927 = vmax.xlane.f32.xlu0 %v1713
    %v1928 = vpop.xlane.xlu0 %1927
    %1929 = vmax.xlane.f32.xlu0 %v1716
    %v1930 = vpop.xlane.xlu0 %1929
    %1931 = vmax.xlane.f32.xlu0 %v1721
    %v1932 = vpop.xlane.xlu0 %1931
    %1933 = vmax.xlane.f32.xlu0 %v1724
    %v1934 = vpop.xlane.xlu0 %1933
    %1935 = vmax.xlane.f32.xlu0 %v1729
    %v1936 = vpop.xlane.xlu0 %1935
    %1937 = vmax.xlane.f32.xlu0 %v1732
    %v1938 = vpop.xlane.xlu0 %1937
    %1939 = vmax.xlane.f32.xlu0 %v1737
    %v1940 = vpop.xlane.xlu0 %1939
    %1941 = vmax.xlane.f32.xlu0 %v1740
    %v1942 = vpop.xlane.xlu0 %1941
    %1943 = vmax.xlane.f32.xlu0 %v1745
    %v1944 = vpop.xlane.xlu0 %1943
    %1945 = vmax.xlane.f32.xlu0 %v1748
    %v1946 = vpop.xlane.xlu0 %1945
    %1947 = vmax.xlane.f32.xlu0 %v1753
    %v1948 = vpop.xlane.xlu0 %1947
    %1949 = vmax.xlane.f32.xlu0 %v1756
    %v1950 = vpop.xlane.xlu0 %1949
    %1951 = vmax.xlane.f32.xlu0 %v1761
    %v1952 = vpop.xlane.xlu0 %1951
    %1953 = vmax.xlane.f32.xlu0 %v1764
    %v1954 = vpop.xlane.xlu0 %1953
    %1955 = vmax.xlane.f32.xlu0 %v1769
    %v1956 = vpop.xlane.xlu0 %1955
    %1957 = vmax.xlane.f32.xlu0 %v1772
    %v1958 = vpop.xlane.xlu0 %1957
    %1959 = vmax.xlane.f32.xlu0 %v1777
    %v1960 = vpop.xlane.xlu0 %1959
    %1961 = vmax.xlane.f32.xlu0 %v1780
    %v1962 = vpop.xlane.xlu0 %1961
    %1963 = vmax.xlane.f32.xlu0 %v1785
    %v1964 = vpop.xlane.xlu0 %1963
    %1965 = vmax.xlane.f32.xlu0 %v1788
    %v1966 = vpop.xlane.xlu0 %1965
    %1967 = vmax.xlane.f32.xlu0 %v1793
    %v1968 = vpop.xlane.xlu0 %1967
    %1969 = vmax.xlane.f32.xlu0 %v1796
    %v1970 = vpop.xlane.xlu0 %1969
    %1971 = vmax.xlane.f32.xlu0 %v1801
    %v1972 = vpop.xlane.xlu0 %1971
    %1973 = vmax.xlane.f32.xlu0 %v1804
    %v1974 = vpop.xlane.xlu0 %1973
    %1975 = vmax.xlane.f32.xlu0 %v1809
    %v1976 = vpop.xlane.xlu0 %1975
    %1977 = vmax.xlane.f32.xlu0 %v1812
    %v1978 = vpop.xlane.xlu0 %1977
    %1979 = vmax.xlane.f32.xlu0 %v1817
    %v1980 = vpop.xlane.xlu0 %1979
    %1981 = vmax.xlane.f32.xlu0 %v1820
    %v1982 = vpop.xlane.xlu0 %1981
    %1983 = vmax.xlane.f32.xlu0 %v1825
    %v1984 = vpop.xlane.xlu0 %1983
    %1985 = vmax.xlane.f32.xlu0 %v1828
    %v1986 = vpop.xlane.xlu0 %1985
    %1987 = vmax.xlane.f32.xlu0 %v1833
    %v1988 = vpop.xlane.xlu0 %1987
    %1989 = vmax.xlane.f32.xlu0 %v1836
    %v1990 = vpop.xlane.xlu0 %1989
    %v1991 = vsub.f32 %v1537, %v1840
    %v1992 = vsub.f32 %v1540, %v1842
    %v1993 = vsub.f32 %v1545, %v1844
    %v1994 = vsub.f32 %v1548, %v1846
    %v1995 = vsub.f32 %v1553, %v1848
    %v1996 = vsub.f32 %v1556, %v1850
    %v1997 = vsub.f32 %v1561, %v1852
    %v1998 = vsub.f32 %v1564, %v1854
    %v1999 = vsub.f32 %v1569, %v1856
    %v2000 = vsub.f32 %v1572, %v1858
    %v2001 = vsub.f32 %v1577, %v1860
    %v2002 = vsub.f32 %v1580, %v1862
    %v2003 = vsub.f32 %v1585, %v1864
    %v2004 = vsub.f32 %v1588, %v1866
    %v2005 = vsub.f32 %v1593, %v1868
    %v2006 = vsub.f32 %v1596, %v1870
    %v2007 = vsub.f32 %v1601, %v1872
    %v2008 = vsub.f32 %v1604, %v1874
    %v2009 = vsub.f32 %v1609, %v1876
    %v2010 = vsub.f32 %v1612, %v1878
    %v2011 = vsub.f32 %v1617, %v1880
    %v2012 = vsub.f32 %v1620, %v1882
    %v2013 = vsub.f32 %v1625, %v1884
    %v2014 = vsub.f32 %v1628, %v1886
    %v2015 = vsub.f32 %v1633, %v1888
    %v2016 = vsub.f32 %v1636, %v1890
    %v2017 = vsub.f32 %v1641, %v1892
    %v2018 = vsub.f32 %v1644, %v1894
    %v2019 = vsub.f32 %v1649, %v1896
    %v2020 = vsub.f32 %v1652, %v1898
    %v2021 = vsub.f32 %v1657, %v1900
    %v2022 = vsub.f32 %v1660, %v1902
    %v2023 = vsub.f32 %v1665, %v1904
    %v2024 = vsub.f32 %v1668, %v1906
    %v2025 = vsub.f32 %v1673, %v1908
    %v2026 = vsub.f32 %v1676, %v1910
    %v2027 = vsub.f32 %v1681, %v1912
    %v2028 = vsub.f32 %v1684, %v1914
    %v2029 = vsub.f32 %v1689, %v1916
    %v2030 = vsub.f32 %v1692, %v1918
    %v2031 = vsub.f32 %v1697, %v1920
    %v2032 = vsub.f32 %v1700, %v1922
    %v2033 = vsub.f32 %v1705, %v1924
    %v2034 = vsub.f32 %v1708, %v1926
    %v2035 = vsub.f32 %v1713, %v1928
    %v2036 = vsub.f32 %v1716, %v1930
    %v2037 = vsub.f32 %v1721, %v1932
    %v2038 = vsub.f32 %v1724, %v1934
    %v2039 = vsub.f32 %v1729, %v1936
    %v2040 = vsub.f32 %v1732, %v1938
    %v2041 = vsub.f32 %v1737, %v1940
    %v2042 = vsub.f32 %v1740, %v1942
    %v2043 = vsub.f32 %v1745, %v1944
    %v2044 = vsub.f32 %v1748, %v1946
    %v2045 = vsub.f32 %v1753, %v1948
    %v2046 = vsub.f32 %v1756, %v1950
    %v2047 = vsub.f32 %v1761, %v1952
    %v2048 = vsub.f32 %v1764, %v1954
    %v2049 = vsub.f32 %v1769, %v1956
    %v2050 = vsub.f32 %v1772, %v1958
    %v2051 = vsub.f32 %v1777, %v1960
    %v2052 = vsub.f32 %v1780, %v1962
    %v2053 = vsub.f32 %v1785, %v1964
    %v2054 = vsub.f32 %v1788, %v1966
    %v2055 = vsub.f32 %v1793, %v1968
    %v2056 = vsub.f32 %v1796, %v1970
    %v2057 = vsub.f32 %v1801, %v1972
    %v2058 = vsub.f32 %v1804, %v1974
    %v2059 = vsub.f32 %v1809, %v1976
    %v2060 = vsub.f32 %v1812, %v1978
    %v2061 = vsub.f32 %v1817, %v1980
    %v2062 = vsub.f32 %v1820, %v1982
    %v2063 = vsub.f32 %v1825, %v1984
    %v2064 = vsub.f32 %v1828, %v1986
    %v2065 = vsub.f32 %v1833, %v1988
    %v2066 = vsub.f32 %v1836, %v1990
    %v2067 = vmul.f32 %v1991, 1.442695
    %v2068 = vpow.pop %v2067
    %v2069 = vmul.f32 %v1992, 1.442695
    %v2070 = vpow.pop %v2069
    %v2071 = vmul.f32 %v1993, 1.442695
    %v2072 = vpow.pop %v2071
    %v2073 = vmul.f32 %v1994, 1.442695
    %v2074 = vpow.pop %v2073
    %v2075 = vmul.f32 %v1995, 1.442695
    %v2076 = vpow.pop %v2075
    %v2077 = vmul.f32 %v1996, 1.442695
    %v2078 = vpow.pop %v2077
    %v2079 = vmul.f32 %v1997, 1.442695
    %v2080 = vpow.pop %v2079
    %v2081 = vmul.f32 %v1998, 1.442695
    %v2082 = vpow.pop %v2081
    %v2083 = vmul.f32 %v1999, 1.442695
    %v2084 = vpow.pop %v2083
    %v2085 = vmul.f32 %v2000, 1.442695
    %v2086 = vpow.pop %v2085
    %v2087 = vmul.f32 %v2001, 1.442695
    %v2088 = vpow.pop %v2087
    %v2089 = vmul.f32 %v2002, 1.442695
    %v2090 = vpow.pop %v2089
    %v2091 = vmul.f32 %v2003, 1.442695
    %v2092 = vpow.pop %v2091
    %v2093 = vmul.f32 %v2004, 1.442695
    %v2094 = vpow.pop %v2093
    %v2095 = vmul.f32 %v2005, 1.442695
    %v2096 = vpow.pop %v2095
    %v2097 = vmul.f32 %v2006, 1.442695
    %v2098 = vpow.pop %v2097
    %v2099 = vmul.f32 %v2007, 1.442695
    %v2100 = vpow.pop %v2099
    %v2101 = vmul.f32 %v2008, 1.442695
    %v2102 = vpow.pop %v2101
    %v2103 = vmul.f32 %v2009, 1.442695
    %v2104 = vpow.pop %v2103
    %v2105 = vmul.f32 %v2010, 1.442695
    %v2106 = vpow.pop %v2105
    %v2107 = vmul.f32 %v2011, 1.442695
    %v2108 = vpow.pop %v2107
    %v2109 = vmul.f32 %v2012, 1.442695
    %v2110 = vpow.pop %v2109
    %v2111 = vmul.f32 %v2013, 1.442695
    %v2112 = vpow.pop %v2111
    %v2113 = vmul.f32 %v2014, 1.442695
    %v2114 = vpow.pop %v2113
    %v2115 = vmul.f32 %v2015, 1.442695
    %v2116 = vpow.pop %v2115
    %v2117 = vmul.f32 %v2016, 1.442695
    %v2118 = vpow.pop %v2117
    %v2119 = vmul.f32 %v2017, 1.442695
    %v2120 = vpow.pop %v2119
    %v2121 = vmul.f32 %v2018, 1.442695
    %v2122 = vpow.pop %v2121
    %v2123 = vmul.f32 %v2019, 1.442695
    %v2124 = vpow.pop %v2123
    %v2125 = vmul.f32 %v2020, 1.442695
    %v2126 = vpow.pop %v2125
    %v2127 = vmul.f32 %v2021, 1.442695
    %v2128 = vpow.pop %v2127
    %v2129 = vmul.f32 %v2022, 1.442695
    %v2130 = vpow.pop %v2129
    %v2131 = vmul.f32 %v2023, 1.442695
    %v2132 = vpow.pop %v2131
    %v2133 = vmul.f32 %v2024, 1.442695
    %v2134 = vpow.pop %v2133
    %v2135 = vmul.f32 %v2025, 1.442695
    %v2136 = vpow.pop %v2135
    %v2137 = vmul.f32 %v2026, 1.442695
    %v2138 = vpow.pop %v2137
    %v2139 = vmul.f32 %v2027, 1.442695
    %v2140 = vpow.pop %v2139
    %v2141 = vmul.f32 %v2028, 1.442695
    %v2142 = vpow.pop %v2141
    %v2143 = vmul.f32 %v2029, 1.442695
    %v2144 = vpow.pop %v2143
    %v2145 = vmul.f32 %v2030, 1.442695
    %v2146 = vpow.pop %v2145
    %v2147 = vmul.f32 %v2031, 1.442695
    %v2148 = vpow.pop %v2147
    %v2149 = vmul.f32 %v2032, 1.442695
    %v2150 = vpow.pop %v2149
    %v2151 = vmul.f32 %v2033, 1.442695
    %v2152 = vpow.pop %v2151
    %v2153 = vmul.f32 %v2034, 1.442695
    %v2154 = vpow.pop %v2153
    %v2155 = vmul.f32 %v2035, 1.442695
    %v2156 = vpow.pop %v2155
    %v2157 = vmul.f32 %v2036, 1.442695
    %v2158 = vpow.pop %v2157
    %v2159 = vmul.f32 %v2037, 1.442695
    %v2160 = vpow.pop %v2159
    %v2161 = vmul.f32 %v2038, 1.442695
    %v2162 = vpow.pop %v2161
    %v2163 = vmul.f32 %v2039, 1.442695
    %v2164 = vpow.pop %v2163
    %v2165 = vmul.f32 %v2040, 1.442695
    %v2166 = vpow.pop %v2165
    %v2167 = vmul.f32 %v2041, 1.442695
    %v2168 = vpow.pop %v2167
    %v2169 = vmul.f32 %v2042, 1.442695
    %v2170 = vpow.pop %v2169
    %v2171 = vmul.f32 %v2043, 1.442695
    %v2172 = vpow.pop %v2171
    %v2173 = vmul.f32 %v2044, 1.442695
    %v2174 = vpow.pop %v2173
    %v2175 = vmul.f32 %v2045, 1.442695
    %v2176 = vpow.pop %v2175
    %v2177 = vmul.f32 %v2046, 1.442695
    %v2178 = vpow.pop %v2177
    %v2179 = vmul.f32 %v2047, 1.442695
    %v2180 = vpow.pop %v2179
    %v2181 = vmul.f32 %v2048, 1.442695
    %v2182 = vpow.pop %v2181
    %v2183 = vmul.f32 %v2049, 1.442695
    %v2184 = vpow.pop %v2183
    %v2185 = vmul.f32 %v2050, 1.442695
    %v2186 = vpow.pop %v2185
    %v2187 = vmul.f32 %v2051, 1.442695
    %v2188 = vpow.pop %v2187
    %v2189 = vmul.f32 %v2052, 1.442695
    %v2190 = vpow.pop %v2189
    %v2191 = vmul.f32 %v2053, 1.442695
    %v2192 = vpow.pop %v2191
    %v2193 = vmul.f32 %v2054, 1.442695
    %v2194 = vpow.pop %v2193
    %v2195 = vmul.f32 %v2055, 1.442695
    %v2196 = vpow.pop %v2195
    %v2197 = vmul.f32 %v2056, 1.442695
    %v2198 = vpow.pop %v2197
    %v2199 = vmul.f32 %v2057, 1.442695
    %v2200 = vpow.pop %v2199
    %v2201 = vmul.f32 %v2058, 1.442695
    %v2202 = vpow.pop %v2201
    %v2203 = vmul.f32 %v2059, 1.442695
    %v2204 = vpow.pop %v2203
    %v2205 = vmul.f32 %v2060, 1.442695
    %v2206 = vpow.pop %v2205
    %v2207 = vmul.f32 %v2061, 1.442695
    %v2208 = vpow.pop %v2207
    %v2209 = vmul.f32 %v2062, 1.442695
    %v2210 = vpow.pop %v2209
    %v2211 = vmul.f32 %v2063, 1.442695
    %v2212 = vpow.pop %v2211
    %v2213 = vmul.f32 %v2064, 1.442695
    %v2214 = vpow.pop %v2213
    %v2215 = vmul.f32 %v2065, 1.442695
    %v2216 = vpow.pop %v2215
    %v2217 = vmul.f32 %v2066, 1.442695
    %v2218 = vpow.pop %v2217
    %2219 = vadd.xlane.f32.xlu0 %v2068
    %v2220 = vpop.xlane.xlu0 %2219
    %2221 = vadd.xlane.f32.xlu0 %v2070
    %v2222 = vpop.xlane.xlu0 %2221
    %2223 = vadd.xlane.f32.xlu0 %v2072
    %v2224 = vpop.xlane.xlu0 %2223
    %2225 = vadd.xlane.f32.xlu0 %v2074
    %v2226 = vpop.xlane.xlu0 %2225
    %2227 = vadd.xlane.f32.xlu0 %v2076
    %v2228 = vpop.xlane.xlu0 %2227
    %2229 = vadd.xlane.f32.xlu0 %v2078
    %v2230 = vpop.xlane.xlu0 %2229
    %2231 = vadd.xlane.f32.xlu0 %v2080
    %v2232 = vpop.xlane.xlu0 %2231
    %2233 = vadd.xlane.f32.xlu0 %v2082
    %v2234 = vpop.xlane.xlu0 %2233
    %2235 = vadd.xlane.f32.xlu0 %v2084
    %v2236 = vpop.xlane.xlu0 %2235
    %2237 = vadd.xlane.f32.xlu0 %v2086
    %v2238 = vpop.xlane.xlu0 %2237
    %2239 = vadd.xlane.f32.xlu0 %v2088
    %v2240 = vpop.xlane.xlu0 %2239
    %2241 = vadd.xlane.f32.xlu0 %v2090
    %v2242 = vpop.xlane.xlu0 %2241
    %2243 = vadd.xlane.f32.xlu0 %v2092
    %v2244 = vpop.xlane.xlu0 %2243
    %2245 = vadd.xlane.f32.xlu0 %v2094
    %v2246 = vpop.xlane.xlu0 %2245
    %2247 = vadd.xlane.f32.xlu0 %v2096
    %v2248 = vpop.xlane.xlu0 %2247
    %2249 = vadd.xlane.f32.xlu0 %v2098
    %v2250 = vpop.xlane.xlu0 %2249
    %2251 = vadd.xlane.f32.xlu0 %v2100
    %v2252 = vpop.xlane.xlu0 %2251
    %2253 = vadd.xlane.f32.xlu0 %v2102
    %v2254 = vpop.xlane.xlu0 %2253
    %2255 = vadd.xlane.f32.xlu0 %v2104
    %v2256 = vpop.xlane.xlu0 %2255
    %2257 = vadd.xlane.f32.xlu0 %v2106
    %v2258 = vpop.xlane.xlu0 %2257
    %2259 = vadd.xlane.f32.xlu0 %v2108
    %v2260 = vpop.xlane.xlu0 %2259
    %2261 = vadd.xlane.f32.xlu0 %v2110
    %v2262 = vpop.xlane.xlu0 %2261
    %2263 = vadd.xlane.f32.xlu0 %v2112
    %v2264 = vpop.xlane.xlu0 %2263
    %2265 = vadd.xlane.f32.xlu0 %v2114
    %v2266 = vpop.xlane.xlu0 %2265
    %2267 = vadd.xlane.f32.xlu0 %v2116
    %v2268 = vpop.xlane.xlu0 %2267
    %2269 = vadd.xlane.f32.xlu0 %v2118
    %v2270 = vpop.xlane.xlu0 %2269
    %2271 = vadd.xlane.f32.xlu0 %v2120
    %v2272 = vpop.xlane.xlu0 %2271
    %2273 = vadd.xlane.f32.xlu0 %v2122
    %v2274 = vpop.xlane.xlu0 %2273
    %2275 = vadd.xlane.f32.xlu0 %v2124
    %v2276 = vpop.xlane.xlu0 %2275
    %2277 = vadd.xlane.f32.xlu0 %v2126
    %v2278 = vpop.xlane.xlu0 %2277
    %2279 = vadd.xlane.f32.xlu0 %v2128
    %v2280 = vpop.xlane.xlu0 %2279
    %2281 = vadd.xlane.f32.xlu0 %v2130
    %v2282 = vpop.xlane.xlu0 %2281
    %2283 = vadd.xlane.f32.xlu0 %v2132
    %v2284 = vpop.xlane.xlu0 %2283
    %2285 = vadd.xlane.f32.xlu0 %v2134
    %v2286 = vpop.xlane.xlu0 %2285
    %2287 = vadd.xlane.f32.xlu0 %v2136
    %v2288 = vpop.xlane.xlu0 %2287
    %2289 = vadd.xlane.f32.xlu0 %v2138
    %v2290 = vpop.xlane.xlu0 %2289
    %2291 = vadd.xlane.f32.xlu0 %v2140
    %v2292 = vpop.xlane.xlu0 %2291
    %2293 = vadd.xlane.f32.xlu0 %v2142
    %v2294 = vpop.xlane.xlu0 %2293
    %2295 = vadd.xlane.f32.xlu0 %v2144
    %v2296 = vpop.xlane.xlu0 %2295
    %2297 = vadd.xlane.f32.xlu0 %v2146
    %v2298 = vpop.xlane.xlu0 %2297
    %2299 = vadd.xlane.f32.xlu0 %v2148
    %v2300 = vpop.xlane.xlu0 %2299
    %2301 = vadd.xlane.f32.xlu0 %v2150
    %v2302 = vpop.xlane.xlu0 %2301
    %2303 = vadd.xlane.f32.xlu0 %v2152
    %v2304 = vpop.xlane.xlu0 %2303
    %2305 = vadd.xlane.f32.xlu0 %v2154
    %v2306 = vpop.xlane.xlu0 %2305
    %2307 = vadd.xlane.f32.xlu0 %v2156
    %v2308 = vpop.xlane.xlu0 %2307
    %2309 = vadd.xlane.f32.xlu0 %v2158
    %v2310 = vpop.xlane.xlu0 %2309
    %2311 = vadd.xlane.f32.xlu0 %v2160
    %v2312 = vpop.xlane.xlu0 %2311
    %2313 = vadd.xlane.f32.xlu0 %v2162
    %v2314 = vpop.xlane.xlu0 %2313
    %2315 = vadd.xlane.f32.xlu0 %v2164
    %v2316 = vpop.xlane.xlu0 %2315
    %2317 = vadd.xlane.f32.xlu0 %v2166
    %v2318 = vpop.xlane.xlu0 %2317
    %2319 = vadd.xlane.f32.xlu0 %v2168
    %v2320 = vpop.xlane.xlu0 %2319
    %2321 = vadd.xlane.f32.xlu0 %v2170
    %v2322 = vpop.xlane.xlu0 %2321
    %2323 = vadd.xlane.f32.xlu0 %v2172
    %v2324 = vpop.xlane.xlu0 %2323
    %2325 = vadd.xlane.f32.xlu0 %v2174
    %v2326 = vpop.xlane.xlu0 %2325
    %2327 = vadd.xlane.f32.xlu0 %v2176
    %v2328 = vpop.xlane.xlu0 %2327
    %2329 = vadd.xlane.f32.xlu0 %v2178
    %v2330 = vpop.xlane.xlu0 %2329
    %2331 = vadd.xlane.f32.xlu0 %v2180
    %v2332 = vpop.xlane.xlu0 %2331
    %2333 = vadd.xlane.f32.xlu0 %v2182
    %v2334 = vpop.xlane.xlu0 %2333
    %2335 = vadd.xlane.f32.xlu0 %v2184
    %v2336 = vpop.xlane.xlu0 %2335
    %2337 = vadd.xlane.f32.xlu0 %v2186
    %v2338 = vpop.xlane.xlu0 %2337
    %2339 = vadd.xlane.f32.xlu0 %v2188
    %v2340 = vpop.xlane.xlu0 %2339
    %2341 = vadd.xlane.f32.xlu0 %v2190
    %v2342 = vpop.xlane.xlu0 %2341
    %2343 = vadd.xlane.f32.xlu0 %v2192
    %v2344 = vpop.xlane.xlu0 %2343
    %2345 = vadd.xlane.f32.xlu0 %v2194
    %v2346 = vpop.xlane.xlu0 %2345
    %2347 = vadd.xlane.f32.xlu0 %v2196
    %v2348 = vpop.xlane.xlu0 %2347
    %2349 = vadd.xlane.f32.xlu0 %v2198
    %v2350 = vpop.xlane.xlu0 %2349
    %2351 = vadd.xlane.f32.xlu0 %v2200
    %v2352 = vpop.xlane.xlu0 %2351
    %2353 = vadd.xlane.f32.xlu0 %v2202
    %v2354 = vpop.xlane.xlu0 %2353
    %2355 = vadd.xlane.f32.xlu0 %v2204
    %v2356 = vpop.xlane.xlu0 %2355
    %2357 = vadd.xlane.f32.xlu0 %v2206
    %v2358 = vpop.xlane.xlu0 %2357
    %2359 = vadd.xlane.f32.xlu0 %v2208
    %v2360 = vpop.xlane.xlu0 %2359
    %2361 = vadd.xlane.f32.xlu0 %v2210
    %v2362 = vpop.xlane.xlu0 %2361
    %2363 = vadd.xlane.f32.xlu0 %v2212
    %v2364 = vpop.xlane.xlu0 %2363
    %2365 = vadd.xlane.f32.xlu0 %v2214
    %v2366 = vpop.xlane.xlu0 %2365
    %2367 = vadd.xlane.f32.xlu0 %v2216
    %v2368 = vpop.xlane.xlu0 %2367
    %2369 = vadd.xlane.f32.xlu0 %v2218
    %v2370 = vpop.xlane.xlu0 %2369
    %v2371 = vrcp.pop %v2220
    %v2372 = vmul.f32 %v2068, %v2371
    %v2373 = vrcp.pop %v2222
    %v2374 = vmul.f32 %v2070, %v2373
    %v2375 = vrcp.pop %v2224
    %v2376 = vmul.f32 %v2072, %v2375
    %v2377 = vrcp.pop %v2226
    %v2378 = vmul.f32 %v2074, %v2377
    %v2379 = vrcp.pop %v2228
    %v2380 = vmul.f32 %v2076, %v2379
    %v2381 = vrcp.pop %v2230
    %v2382 = vmul.f32 %v2078, %v2381
    %v2383 = vrcp.pop %v2232
    %v2384 = vmul.f32 %v2080, %v2383
    %v2385 = vrcp.pop %v2234
    %v2386 = vmul.f32 %v2082, %v2385
    %v2387 = vrcp.pop %v2236
    %v2388 = vmul.f32 %v2084, %v2387
    %v2389 = vrcp.pop %v2238
    %v2390 = vmul.f32 %v2086, %v2389
    %v2391 = vrcp.pop %v2240
    %v2392 = vmul.f32 %v2088, %v2391
    %v2393 = vrcp.pop %v2242
    %v2394 = vmul.f32 %v2090, %v2393
    %v2395 = vrcp.pop %v2244
    %v2396 = vmul.f32 %v2092, %v2395
    %v2397 = vrcp.pop %v2246
    %v2398 = vmul.f32 %v2094, %v2397
    %v2399 = vrcp.pop %v2248
    %v2400 = vmul.f32 %v2096, %v2399
    %v2401 = vrcp.pop %v2250
    %v2402 = vmul.f32 %v2098, %v2401
    %v2403 = vrcp.pop %v2252
    %v2404 = vmul.f32 %v2100, %v2403
    %v2405 = vrcp.pop %v2254
    %v2406 = vmul.f32 %v2102, %v2405
    %v2407 = vrcp.pop %v2256
    %v2408 = vmul.f32 %v2104, %v2407
    %v2409 = vrcp.pop %v2258
    %v2410 = vmul.f32 %v2106, %v2409
    %v2411 = vrcp.pop %v2260
    %v2412 = vmul.f32 %v2108, %v2411
    %v2413 = vrcp.pop %v2262
    %v2414 = vmul.f32 %v2110, %v2413
    %v2415 = vrcp.pop %v2264
    %v2416 = vmul.f32 %v2112, %v2415
    %v2417 = vrcp.pop %v2266
    %v2418 = vmul.f32 %v2114, %v2417
    %v2419 = vrcp.pop %v2268
    %v2420 = vmul.f32 %v2116, %v2419
    %v2421 = vrcp.pop %v2270
    %v2422 = vmul.f32 %v2118, %v2421
    %v2423 = vrcp.pop %v2272
    %v2424 = vmul.f32 %v2120, %v2423
    %v2425 = vrcp.pop %v2274
    %v2426 = vmul.f32 %v2122, %v2425
    %v2427 = vrcp.pop %v2276
    %v2428 = vmul.f32 %v2124, %v2427
    %v2429 = vrcp.pop %v2278
    %v2430 = vmul.f32 %v2126, %v2429
    %v2431 = vrcp.pop %v2280
    %v2432 = vmul.f32 %v2128, %v2431
    %v2433 = vrcp.pop %v2282
    %v2434 = vmul.f32 %v2130, %v2433
    %v2435 = vrcp.pop %v2284
    %v2436 = vmul.f32 %v2132, %v2435
    %v2437 = vrcp.pop %v2286
    %v2438 = vmul.f32 %v2134, %v2437
    %v2439 = vrcp.pop %v2288
    %v2440 = vmul.f32 %v2136, %v2439
    %v2441 = vrcp.pop %v2290
    %v2442 = vmul.f32 %v2138, %v2441
    %v2443 = vrcp.pop %v2292
    %v2444 = vmul.f32 %v2140, %v2443
    %v2445 = vrcp.pop %v2294
    %v2446 = vmul.f32 %v2142, %v2445
    %v2447 = vrcp.pop %v2296
    %v2448 = vmul.f32 %v2144, %v2447
    %v2449 = vrcp.pop %v2298
    %v2450 = vmul.f32 %v2146, %v2449
    %v2451 = vrcp.pop %v2300
    %v2452 = vmul.f32 %v2148, %v2451
    %v2453 = vrcp.pop %v2302
    %v2454 = vmul.f32 %v2150, %v2453
    %v2455 = vrcp.pop %v2304
    %v2456 = vmul.f32 %v2152, %v2455
    %v2457 = vrcp.pop %v2306
    %v2458 = vmul.f32 %v2154, %v2457
    %v2459 = vrcp.pop %v2308
    %v2460 = vmul.f32 %v2156, %v2459
    %v2461 = vrcp.pop %v2310
    %v2462 = vmul.f32 %v2158, %v2461
    %v2463 = vrcp.pop %v2312
    %v2464 = vmul.f32 %v2160, %v2463
    %v2465 = vrcp.pop %v2314
    %v2466 = vmul.f32 %v2162, %v2465
    %v2467 = vrcp.pop %v2316
    %v2468 = vmul.f32 %v2164, %v2467
    %v2469 = vrcp.pop %v2318
    %v2470 = vmul.f32 %v2166, %v2469
    %v2471 = vrcp.pop %v2320
    %v2472 = vmul.f32 %v2168, %v2471
    %v2473 = vrcp.pop %v2322
    %v2474 = vmul.f32 %v2170, %v2473
    %v2475 = vrcp.pop %v2324
    %v2476 = vmul.f32 %v2172, %v2475
    %v2477 = vrcp.pop %v2326
    %v2478 = vmul.f32 %v2174, %v2477
    %v2479 = vrcp.pop %v2328
    %v2480 = vmul.f32 %v2176, %v2479
    %v2481 = vrcp.pop %v2330
    %v2482 = vmul.f32 %v2178, %v2481
    %v2483 = vrcp.pop %v2332
    %v2484 = vmul.f32 %v2180, %v2483
    %v2485 = vrcp.pop %v2334
    %v2486 = vmul.f32 %v2182, %v2485
    %v2487 = vrcp.pop %v2336
    %v2488 = vmul.f32 %v2184, %v2487
    %v2489 = vrcp.pop %v2338
    %v2490 = vmul.f32 %v2186, %v2489
    %v2491 = vrcp.pop %v2340
    %v2492 = vmul.f32 %v2188, %v2491
    %v2493 = vrcp.pop %v2342
    %v2494 = vmul.f32 %v2190, %v2493
    %v2495 = vrcp.pop %v2344
    %v2496 = vmul.f32 %v2192, %v2495
    %v2497 = vrcp.pop %v2346
    %v2498 = vmul.f32 %v2194, %v2497
    %v2499 = vrcp.pop %v2348
    %v2500 = vmul.f32 %v2196, %v2499
    %v2501 = vrcp.pop %v2350
    %v2502 = vmul.f32 %v2198, %v2501
    %v2503 = vrcp.pop %v2352
    %v2504 = vmul.f32 %v2200, %v2503
    %v2505 = vrcp.pop %v2354
    %v2506 = vmul.f32 %v2202, %v2505
    %v2507 = vrcp.pop %v2356
    %v2508 = vmul.f32 %v2204, %v2507
    %v2509 = vrcp.pop %v2358
    %v2510 = vmul.f32 %v2206, %v2509
    %v2511 = vrcp.pop %v2360
    %v2512 = vmul.f32 %v2208, %v2511
    %v2513 = vrcp.pop %v2362
    %v2514 = vmul.f32 %v2210, %v2513
    %v2515 = vrcp.pop %v2364
    %v2516 = vmul.f32 %v2212, %v2515
    %v2517 = vrcp.pop %v2366
    %v2518 = vmul.f32 %v2214, %v2517
    %v2519 = vrcp.pop %v2368
    %v2520 = vmul.f32 %v2216, %v2519
    %v2521 = vrcp.pop %v2370
    %v2522 = vmul.f32 %v2218, %v2521
    %2523 = vst [vmem:[#allocation10] sm:$0xff] %v2372
    %2524 = vst [vmem:[#allocation10 + $0x8] sm:$0xff] %v2374
    %2525 = vst [vmem:[#allocation10 + $0x10] sm:$0xff] %v2376
    %2526 = vst [vmem:[#allocation10 + $0x18] sm:$0xff] %v2378
    %2527 = vst [vmem:[#allocation10 + $0x20] sm:$0xff] %v2380
    %2528 = vst [vmem:[#allocation10 + $0x28] sm:$0xff] %v2382
    %2529 = vst [vmem:[#allocation10 + $0x30] sm:$0xff] %v2384
    %2530 = vst [vmem:[#allocation10 + $0x38] sm:$0xff] %v2386
    %2531 = vst [vmem:[#allocation10 + $0x40] sm:$0xff] %v2388
    %2532 = vst [vmem:[#allocation10 + $0x48] sm:$0xff] %v2390
    %2533 = vst [vmem:[#allocation10 + $0x50] sm:$0xff] %v2392
    %2534 = vst [vmem:[#allocation10 + $0x58] sm:$0xff] %v2394
    %2535 = vst [vmem:[#allocation10 + $0x60] sm:$0xff] %v2396
    %2536 = vst [vmem:[#allocation10 + $0x68] sm:$0xff] %v2398
    %2537 = vst [vmem:[#allocation10 + $0x70] sm:$0xff] %v2400
    %2538 = vst [vmem:[#allocation10 + $0x78] sm:$0xff] %v2402
    %2539 = vst [vmem:[#allocation10 + $0x80] sm:$0xff] %v2404
    %2540 = vst [vmem:[#allocation10 + $0x88] sm:$0xff] %v2406
    %2541 = vst [vmem:[#allocation10 + $0x90] sm:$0xff] %v2408
    %2542 = vst [vmem:[#allocation10 + $0x98] sm:$0xff] %v2410
    %2543 = vst [vmem:[#allocation10 + $0xa0] sm:$0xff] %v2412
    %2544 = vst [vmem:[#allocation10 + $0xa8] sm:$0xff] %v2414
    %2545 = vst [vmem:[#allocation10 + $0xb0] sm:$0xff] %v2416
    %2546 = vst [vmem:[#allocation10 + $0xb8] sm:$0xff] %v2418
    %2547 = vst [vmem:[#allocation10 + $0xc0] sm:$0xff] %v2420
    %2548 = vst [vmem:[#allocation10 + $0xc8] sm:$0xff] %v2422
    %2549 = vst [vmem:[#allocation10 + $0xd0] sm:$0xff] %v2424
    %2550 = vst [vmem:[#allocation10 + $0xd8] sm:$0xff] %v2426
    %2551 = vst [vmem:[#allocation10 + $0xe0] sm:$0xff] %v2428
    %2552 = vst [vmem:[#allocation10 + $0xe8] sm:$0xff] %v2430
    %2553 = vst [vmem:[#allocation10 + $0xf0] sm:$0xff] %v2432
    %2554 = vst [vmem:[#allocation10 + $0xf8] sm:$0xff] %v2434
    %2555 = vst [vmem:[#allocation10 + $0x100] sm:$0xff] %v2436
    %2556 = vst [vmem:[#allocation10 + $0x108] sm:$0xff] %v2438
    %2557 = vst [vmem:[#allocation10 + $0x110] sm:$0xff] %v2440
    %2558 = vst [vmem:[#allocation10 + $0x118] sm:$0xff] %v2442
    %2559 = vst [vmem:[#allocation10 + $0x120] sm:$0xff] %v2444
    %2560 = vst [vmem:[#allocation10 + $0x128] sm:$0xff] %v2446
    %2561 = vst [vmem:[#allocation10 + $0x130] sm:$0xff] %v2448
    %2562 = vst [vmem:[#allocation10 + $0x138] sm:$0xff] %v2450
    %2563 = vst [vmem:[#allocation10 + $0x140] sm:$0xff] %v2452
    %2564 = vst [vmem:[#allocation10 + $0x148] sm:$0xff] %v2454
    %2565 = vst [vmem:[#allocation10 + $0x150] sm:$0xff] %v2456
    %2566 = vst [vmem:[#allocation10 + $0x158] sm:$0xff] %v2458
    %2567 = vst [vmem:[#allocation10 + $0x160] sm:$0xff] %v2460
    %2568 = vst [vmem:[#allocation10 + $0x168] sm:$0xff] %v2462
    %2569 = vst [vmem:[#allocation10 + $0x170] sm:$0xff] %v2464
    %2570 = vst [vmem:[#allocation10 + $0x178] sm:$0xff] %v2466
    %2571 = vst [vmem:[#allocation10 + $0x180] sm:$0xff] %v2468
    %2572 = vst [vmem:[#allocation10 + $0x188] sm:$0xff] %v2470
    %2573 = vst [vmem:[#allocation10 + $0x190] sm:$0xff] %v2472
    %2574 = vst [vmem:[#allocation10 + $0x198] sm:$0xff] %v2474
    %2575 = vst [vmem:[#allocation10 + $0x1a0] sm:$0xff] %v2476
    %2576 = vst [vmem:[#allocation10 + $0x1a8] sm:$0xff] %v2478
    %2577 = vst [vmem:[#allocation10 + $0x1b0] sm:$0xff] %v2480
    %2578 = vst [vmem:[#allocation10 + $0x1b8] sm:$0xff] %v2482
    %2579 = vst [vmem:[#allocation10 + $0x1c0] sm:$0xff] %v2484
    %2580 = vst [vmem:[#allocation10 + $0x1c8] sm:$0xff] %v2486
    %2581 = vst [vmem:[#allocation10 + $0x1d0] sm:$0xff] %v2488
    %2582 = vst [vmem:[#allocation10 + $0x1d8] sm:$0xff] %v2490
    %2583 = vst [vmem:[#allocation10 + $0x1e0] sm:$0xff] %v2492
    %2584 = vst [vmem:[#allocation10 + $0x1e8] sm:$0xff] %v2494
    %2585 = vst [vmem:[#allocation10 + $0x1f0] sm:$0xff] %v2496
    %2586 = vst [vmem:[#allocation10 + $0x1f8] sm:$0xff] %v2498
    %2587 = vst [vmem:[#allocation10 + $0x200] sm:$0xff] %v2500
    %2588 = vst [vmem:[#allocation10 + $0x208] sm:$0xff] %v2502
    %2589 = vst [vmem:[#allocation10 + $0x210] sm:$0xff] %v2504
    %2590 = vst [vmem:[#allocation10 + $0x218] sm:$0xff] %v2506
    %2591 = vst [vmem:[#allocation10 + $0x220] sm:$0xff] %v2508
    %2592 = vst [vmem:[#allocation10 + $0x228] sm:$0xff] %v2510
    %2593 = vst [vmem:[#allocation10 + $0x230] sm:$0xff] %v2512
    %2594 = vst [vmem:[#allocation10 + $0x238] sm:$0xff] %v2514
    %2595 = vst [vmem:[#allocation10 + $0x240] sm:$0xff] %v2516
    %2596 = vst [vmem:[#allocation10 + $0x248] sm:$0xff] %v2518
    %2597 = vst [vmem:[#allocation10 + $0x250] sm:$0xff] %v2520
    %2598 = vst [vmem:[#allocation10 + $0x258] sm:$0xff] %v2522
    // Predicated region
    $region46: #{tpu_custom_call.1} parent=1 // pred_check
      _
    $region47: #{tpu_custom_call.1} parent=1 // pred_check_branch
      %2600 = sbr.rel (0) target = $region49
    $region48: #{tpu_custom_call.1} parent=1 // pred_region
      %s2602 = ssub.s32 9728, 9728
      %2603 = vsyncadd [#allocation4], %s2602
      %s2604 = sshll.u32 [#allocation10], 4
      %s2605 = int_to_ptr.vmem [resolvable:$true] %s2604
      %2610 = dma.vmem_to_hbm [thread:$0]  %s2605, 9728, %s7, [#allocation4], 128, 128, 8
    $region49: #{tpu_custom_call.1} parent=1 // pred_fallthru
      _
    // Predicated region
    $region50: #{tpu_custom_call.1} parent=1 // pred_check
      _
    $region51: #{tpu_custom_call.1} parent=1 // pred_check_branch
      %2612 = sbr.rel (0) target = $region53
    $region52: #{tpu_custom_call.1} parent=1 // pred_region
      %2613 = dma.done [#allocation4], 9728
    $region53: #{tpu_custom_call.1} parent=1 // pred_fallthru
      _
    %2614 = vsyncpa [#allocation3], 1
    %2615 = vsyncpa [#allocation6], 1
    %2616 = vsyncpa [#allocation9], 1
    %2617 = vsyncpa [#allocation4], 1

</llo_original>
